<compile_context>
chip_gen: v7x
topology: tpu7x:2x2x1
jax: 0.10.0
libtpu: 0.0.40
codegen_flags: <defaults>
</compile_context>

<pallas_src>
import functools
import math
import jax
import jax.numpy as jnp
from jax import lax
from jax.experimental import pallas as pl
from jax.experimental.pallas import tpu as pltpu

# --- small "config" ---
BATCH = 2
SEQ = 8
HIDDEN = 32
NUM_HEADS = 4
HEAD_SIZE = HIDDEN // NUM_HEADS
LN_EPS = 1e-12
LANE = 128  # lane-dense width for fused QKV / MLP matmuls, the vector slab, and the output

assert 3 * HIDDEN <= LANE and 4 * HIDDEN <= LANE


def _layernorm(x, gamma, beta, eps):
    mu = jnp.mean(x, axis=-1, keepdims=True)
    var = jnp.mean((x - mu) ** 2, axis=-1, keepdims=True)
    return (x - mu) * lax.rsqrt(var + eps) * gamma + beta


def bert_block_kernel(x_ref, keyadd_ref, wqkv_ref, wo_ref, w1_ref, w2_ref, vec_ref,
                      out_ref, *, seq_len, hidden, num_heads):
    # x_ref:      (T, H)      all tokens (B*S) in one tile
    # keyadd_ref: (1, T)      per-key additive mask values (from (B,1,1,S) input)
    # wqkv_ref:   (H, LANE)   [Wq | Wk | Wv | 0-pad]
    # wo_ref:     (H, H)
    # w1_ref:     (H, LANE)   [W1 | 0-pad]   (4H <= LANE)
    # w2_ref:     (LANE, H)   [W2 ; 0-pad rows]
    # vec_ref:    (8, LANE)   rows: bqkv, bo, b1, b2, g1, be1, g2, be2 (zero padded)
    # out_ref:    (T, LANE)   lane-dense output slab; wrapper slices [:, :H]
    head_size = hidden // num_heads
    x = x_ref[...]                          # (T, H)
    vec = vec_ref[...]                      # (8, LANE)
    T = x.shape[0]
    lane = out_ref.shape[1]

    # --- block-diagonal additive mask rebuilt in-register (no (T,T) HBM traffic) ---
    row_idx = lax.broadcasted_iota(jnp.int32, (T, T), 0)
    col_idx = lax.broadcasted_iota(jnp.int32, (T, T), 1)
    if (seq_len & (seq_len - 1)) == 0:      # power-of-two seq: use shifts (always supported)
        shift = seq_len.bit_length() - 1
        row_b = row_idx >> shift
        col_b = col_idx >> shift
    else:
        row_b = row_idx // seq_len
        col_b = col_idx // seq_len
    key_add = jnp.broadcast_to(keyadd_ref[...], (T, T))          # (T, T)
    # -1e9 is safe in f32; if scores move to bf16 use a dtype-aware large-negative.
    mask = jnp.where(row_b == col_b, key_add, jnp.float32(-1e9))

    # --- fused QKV projection: one lane-dense MXU matmul + one bias add ---
    qkv = jnp.dot(x, wqkv_ref[...], preferred_element_type=jnp.float32) + vec[0:1, :]  # (T, LANE)

    scale = 1.0 / math.sqrt(head_size)
    heads = []
    for h in range(num_heads):              # static unroll over 4 heads
        lo = h * head_size
        qh = qkv[:, lo:lo + head_size]                                 # (T, hs)
        kh = qkv[:, hidden + lo:hidden + lo + head_size]               # (T, hs)
        vh = qkv[:, 2 * hidden + lo:2 * hidden + lo + head_size]       # (T, hs)
        # MXU-native trans_b contraction over head_size.
        s = lax.dot_general(qh, kh, (((1,), (1,)), ((), ())),
                            preferred_element_type=jnp.float32) * scale + mask  # (T, T)
        s = s - jnp.max(s, axis=-1, keepdims=True)
        p = jnp.exp(s)
        p = p / jnp.sum(p, axis=-1, keepdims=True)      # exact softmax (f32)
        heads.append(jnp.dot(p, vh, preferred_element_type=jnp.float32))        # (T, hs)
    av = jnp.concatenate(heads, axis=-1)                 # (T, H): one concat, then ONE W_O matmul
    attn = jnp.dot(av, wo_ref[...], preferred_element_type=jnp.float32) + vec[1:2, :hidden]
    # dropout: identity (inference mode)

    y1 = _layernorm(x + attn, vec[4:5, :hidden], vec[5:6, :hidden], LN_EPS)

    # --- MLP, lane-dense (T, LANE) intermediate; padded columns are exactly zero ---
    h1 = jnp.dot(y1, w1_ref[...], preferred_element_type=jnp.float32) + vec[2:3, :]
    h1 = 0.5 * h1 * (1.0 + lax.erf(h1 * (1.0 / math.sqrt(2.0))))   # exact GELU (torch default)
    h2 = jnp.dot(h1, w2_ref[...], preferred_element_type=jnp.float32) + vec[3:4, :hidden]

    y2 = _layernorm(y1 + h2, vec[6:7, :hidden], vec[7:8, :hidden], LN_EPS)

    # Lane-dense (T, 128) store -> full-width unmasked vector stores.
    out_ref[...] = jnp.concatenate(
        [y2, jnp.zeros((T, lane - hidden), jnp.float32)], axis=-1)


def _pad_row(v, width):
    v = jnp.asarray(v, jnp.float32).reshape(-1)
    return jnp.pad(v, (0, width - v.shape[0]))


def pack_params(params):
    """One-time packing of the weights into lane-dense slabs (hoisted out of the call path)."""
    H = HIDDEN
    wqkv = jnp.concatenate([params["wq"], params["wk"], params["wv"]], axis=1)   # (H, 3H)
    wqkv = jnp.pad(wqkv, ((0, 0), (0, LANE - 3 * H))).astype(jnp.float32)        # (H, LANE)
    w1 = jnp.pad(params["w1"], ((0, 0), (0, LANE - 4 * H))).astype(jnp.float32)  # (H, LANE)
    w2 = jnp.pad(params["w2"], ((0, LANE - 4 * H), (0, 0))).astype(jnp.float32)  # (LANE, H)
    wo = params["wo"].astype(jnp.float32)                                        # (H, H)
    bqkv = jnp.concatenate([params["bq"].reshape(-1), params["bk"].reshape(-1),
                            params["bv"].reshape(-1)])
    vec = jnp.stack([
        _pad_row(bqkv, LANE),
        _pad_row(params["bo"], LANE),
        _pad_row(params["b1"], LANE),
        _pad_row(params["b2"], LANE),
        _pad_row(params["g1"], LANE),
        _pad_row(params["be1"], LANE),
        _pad_row(params["g2"], LANE),
        _pad_row(params["be2"], LANE),
    ])                                                                           # (8, LANE)
    return {"wqkv": wqkv, "wo": wo, "w1": w1, "w2": w2, "vec": vec}


@jax.jit
def bert_block(x, additive_attention_mask, packed):
    """x: (B, S, H) f32; additive_attention_mask: key-only (B, 1, 1, S) f32; packed: pack_params()."""
    B, S, H = x.shape
    assert additive_attention_mask.shape == (B, 1, 1, S), "expected key-only (B,1,1,S) mask"
    T = B * S
    x2d = x.reshape(T, H).astype(jnp.float32)
    key_add = additive_attention_mask.astype(jnp.float32).reshape(1, T)   # per-key additive values

    operands = (x2d, key_add, packed["wqkv"], packed["wo"],
                packed["w1"], packed["w2"], packed["vec"])

    in_bytes = sum(int(a.size) * jnp.dtype(a.dtype).itemsize for a in operands)
    out_bytes = T * LANE * 4
    # Tiny footprint (~tens of KiB); generous multiplier still far under v5e's 16 MiB scoped default.
    vmem_limit = int(max(8 * (in_bytes + out_bytes), 2 * 1024 * 1024))

    flops = (2 * T * H * LANE                          # fused QKV
             + NUM_HEADS * 4 * T * T * HEAD_SIZE       # scores + PV per head
             + 2 * T * H * H                           # W_O
             + 2 * T * H * LANE + 2 * T * LANE * H)    # MLP
    transcendentals = NUM_HEADS * T * T + T * LANE + 8 * T

    vmem_spec = pl.BlockSpec(memory_space=pltpu.MemorySpace.VMEM)
    kernel = functools.partial(bert_block_kernel, seq_len=S, hidden=H, num_heads=NUM_HEADS)

    out2d = pl.pallas_call(
        kernel,
        out_shape=jax.ShapeDtypeStruct((T, LANE), jnp.float32),
        in_specs=[vmem_spec] * len(operands),
        out_specs=vmem_spec,
        compiler_params=pltpu.CompilerParams(vmem_limit_bytes=vmem_limit),
        cost_estimate=pl.CostEstimate(flops=int(flops),
                                      transcendentals=int(transcendentals),
                                      bytes_accessed=int(in_bytes + out_bytes)),
    )(*operands)

    return out2d[:, :H].reshape(B, S, H)


def init_params(key):
    ks = jax.random.split(key, 8)
    s = 0.02
    p = {
        # linear weights already stored as (in, out)
        "wq": s * jax.random.normal(ks[0], (HIDDEN, HIDDEN), jnp.float32),
        "wk": s * jax.random.normal(ks[1], (HIDDEN, HIDDEN), jnp.float32),
        "wv": s * jax.random.normal(ks[2], (HIDDEN, HIDDEN), jnp.float32),
        "wo": s * jax.random.normal(ks[3], (HIDDEN, HIDDEN), jnp.float32),
        "w1": s * jax.random.normal(ks[4], (HIDDEN, 4 * HIDDEN), jnp.float32),
        "w2": s * jax.random.normal(ks[5], (4 * HIDDEN, HIDDEN), jnp.float32),
        "bq": 0.01 * jax.random.normal(ks[6], (1, HIDDEN), jnp.float32),
        "bk": jnp.zeros((1, HIDDEN), jnp.float32),
        "bv": 0.01 * jax.random.normal(ks[7], (1, HIDDEN), jnp.float32),
        "bo": jnp.zeros((1, HIDDEN), jnp.float32),
        "b1": jnp.zeros((1, 4 * HIDDEN), jnp.float32),
        "b2": jnp.zeros((1, HIDDEN), jnp.float32),
        "g1": jnp.ones((1, HIDDEN), jnp.float32),
        "be1": jnp.zeros((1, HIDDEN), jnp.float32),
        "g2": jnp.ones((1, HIDDEN), jnp.float32),
        "be2": jnp.zeros((1, HIDDEN), jnp.float32),
    }
    return p


def reference_block(x, mask, p):
    """Pure-JAX reference of the same forward (per-batch attention) for sanity checking."""
    B, S, H = x.shape
    q = x @ p["wq"] + p["bq"]
    k = x @ p["wk"] + p["bk"]
    v = x @ p["wv"] + p["bv"]
    qh = q.reshape(B, S, NUM_HEADS, HEAD_SIZE)
    kh = k.reshape(B, S, NUM_HEADS, HEAD_SIZE)
    vh = v.reshape(B, S, NUM_HEADS, HEAD_SIZE)
    scores = jnp.einsum("bqhd,bkhd->bhqk", qh, kh) / math.sqrt(HEAD_SIZE)
    scores = scores + mask  # (B,1,1,S) broadcast
    probs = jax.nn.softmax(scores, axis=-1)
    av = jnp.einsum("bhqk,bkhd->bqhd", probs, vh).reshape(B, S, H)
    attn = av @ p["wo"] + p["bo"]

    def ln(y, g, b):
        mu = jnp.mean(y, axis=-1, keepdims=True)
        var = jnp.mean((y - mu) ** 2, axis=-1, keepdims=True)
        return (y - mu) * lax.rsqrt(var + LN_EPS) * g + b

    y1 = ln(x + attn, p["g1"], p["be1"])
    h1 = y1 @ p["w1"] + p["b1"]
    h1 = 0.5 * h1 * (1.0 + lax.erf(h1 / math.sqrt(2.0)))
    h2 = h1 @ p["w2"] + p["b2"]
    return ln(y1 + h2, p["g2"], p["be2"])


if __name__ == "__main__":
    key = jax.random.PRNGKey(0)
    kx, kp = jax.random.split(key)
    x = jax.random.normal(kx, (BATCH, SEQ, HIDDEN), jnp.float32)
    # additive mask: batch 0 unmasked, batch 1 masks last two key positions
    mask = jnp.zeros((BATCH, 1, 1, SEQ), jnp.float32)
    mask = mask.at[1, 0, 0, -2:].set(-1e4)

    params = init_params(kp)
    packed = jax.block_until_ready(pack_params(params))   # one-time packing (out of call path)

    out = bert_block(x, mask, packed)
    out = jax.block_until_ready(out)

    with jax.default_matmul_precision("highest"):
        ref = reference_block(x, mask, params)
    ref = jax.block_until_ready(ref)

    assert out.shape == (BATCH, SEQ, HIDDEN)
    err = float(jnp.max(jnp.abs(out - ref)))
    # exact softmax restored -> tight f32 tolerance
    assert jnp.allclose(out, ref, atol=1e-4, rtol=1e-4), err

    print("KERNEL_OK")
</pallas_src>

<mosaic_0001>
module attributes {stable_mosaic.version = 11 : i64} {
  func.func @bert_block_kernel(%arg0: memref<16x32xf32, #tpu.memory_space<vmem>>, %arg1: memref<1x16xf32, #tpu.memory_space<vmem>>, %arg2: memref<32x128xf32, #tpu.memory_space<vmem>>, %arg3: memref<32x32xf32, #tpu.memory_space<vmem>>, %arg4: memref<32x128xf32, #tpu.memory_space<vmem>>, %arg5: memref<128x32xf32, #tpu.memory_space<vmem>>, %arg6: memref<8x128xf32, #tpu.memory_space<vmem>>, %arg7: memref<16x128xf32, #tpu.memory_space<vmem>>) attributes {dimension_semantics = [], scalar_prefetch = 0 : i64, scratch_operands = 0 : i64, tpu.core_type = #tpu.core_type<tc>} {
    %c0 = arith.constant 0 : index
    %c0_0 = arith.constant 0 : index
    %0 = vector.load %arg0[%c0, %c0_0] : memref<16x32xf32, #tpu.memory_space<vmem>>, vector<16x32xf32>
    %c0_1 = arith.constant 0 : index
    %c0_2 = arith.constant 0 : index
    %1 = vector.load %arg6[%c0_1, %c0_2] : memref<8x128xf32, #tpu.memory_space<vmem>>, vector<8x128xf32>
    %2 = tpu.iota {dimensions = array<i32: 0>} : vector<16x16xi32>
    %3 = tpu.iota {dimensions = array<i32: 1>} : vector<16x16xi32>
    %c3_i32 = arith.constant 3 : i32
    %4 = vector.broadcast %c3_i32 : i32 to vector<16x16xi32>
    %5 = arith.shrsi %2, %4 : vector<16x16xi32>
    %c3_i32_3 = arith.constant 3 : i32
    %6 = vector.broadcast %c3_i32_3 : i32 to vector<16x16xi32>
    %7 = arith.shrsi %3, %6 : vector<16x16xi32>
    %c0_4 = arith.constant 0 : index
    %c0_5 = arith.constant 0 : index
    %8 = vector.load %arg1[%c0_4, %c0_5] : memref<1x16xf32, #tpu.memory_space<vmem>>, vector<1x16xf32>
    %9 = vector.shape_cast %8 : vector<1x16xf32> to vector<1x16xf32>
    %10 = vector.broadcast %9 : vector<1x16xf32> to vector<16x16xf32>
    %11 = arith.cmpi eq, %5, %7 : vector<16x16xi32>
    %cst = arith.constant -1.000000e+09 : f32
    %12 = vector.broadcast %cst : f32 to vector<16x16xf32>
    %13 = arith.select %11, %10, %12 : vector<16x16xi1>, vector<16x16xf32>
    %c0_6 = arith.constant 0 : index
    %c0_7 = arith.constant 0 : index
    %14 = vector.load %arg2[%c0_6, %c0_7] : memref<32x128xf32, #tpu.memory_space<vmem>>, vector<32x128xf32>
    %cst_8 = arith.constant dense<0.000000e+00> : vector<16x128xf32>
    %15 = tpu.matmul %0, %14, %cst_8 {dimension_numbers = #tpu.dot_dimension_numbers<[1], [0], [0], [1], [0, 0, 1, 1], [], []>} : vector<16x32xf32>, vector<32x128xf32>, vector<16x128xf32> -> vector<16x128xf32>
    %16 = vector.extract_strided_slice %1 {offsets = [0, 0], sizes = [1, 128], strides = [1, 1]} : vector<8x128xf32> to vector<1x128xf32>
    %17 = vector.broadcast %16 : vector<1x128xf32> to vector<16x128xf32>
    %18 = arith.addf %15, %17 : vector<16x128xf32>
    %19 = vector.extract_strided_slice %18 {offsets = [0, 0], sizes = [16, 8], strides = [1, 1]} : vector<16x128xf32> to vector<16x8xf32>
    %20 = vector.extract_strided_slice %18 {offsets = [0, 32], sizes = [16, 8], strides = [1, 1]} : vector<16x128xf32> to vector<16x8xf32>
    %21 = vector.extract_strided_slice %18 {offsets = [0, 64], sizes = [16, 8], strides = [1, 1]} : vector<16x128xf32> to vector<16x8xf32>
    %cst_9 = arith.constant dense<0.000000e+00> : vector<16x16xf32>
    %22 = tpu.matmul %19, %20, %cst_9 {dimension_numbers = #tpu.dot_dimension_numbers<[1], [1], [0], [0], [0, 0, 1, 0], [], []>} : vector<16x8xf32>, vector<16x8xf32>, vector<16x16xf32> -> vector<16x16xf32>
    %cst_10 = arith.constant 0.353553385 : f32
    %23 = vector.broadcast %cst_10 : f32 to vector<16x16xf32>
    %24 = arith.mulf %22, %23 : vector<16x16xf32>
    %25 = arith.addf %24, %13 : vector<16x16xf32>
    %cst_11 = arith.constant dense<0xFF800000> : vector<16xf32>
    %26 = vector.multi_reduction <maximumf>, %25, %cst_11 [1] : vector<16x16xf32> to vector<16xf32>
    %27 = vector.shape_cast %26 : vector<16xf32> to vector<16x1xf32>
    %28 = vector.broadcast %27 : vector<16x1xf32> to vector<16x16xf32>
    %29 = arith.subf %25, %28 : vector<16x16xf32>
    %30 = math.exp %29 : vector<16x16xf32>
    %cst_12 = arith.constant dense<0.000000e+00> : vector<16xf32>
    %31 = vector.multi_reduction <add>, %30, %cst_12 [1] : vector<16x16xf32> to vector<16xf32>
    %32 = vector.shape_cast %31 : vector<16xf32> to vector<16x1xf32>
    %33 = vector.broadcast %32 : vector<16x1xf32> to vector<16x16xf32>
    %34 = arith.divf %30, %33 : vector<16x16xf32>
    %cst_13 = arith.constant dense<0.000000e+00> : vector<16x8xf32>
    %35 = tpu.matmul %34, %21, %cst_13 {dimension_numbers = #tpu.dot_dimension_numbers<[1], [0], [0], [1], [0, 0, 1, 1], [], []>} : vector<16x16xf32>, vector<16x8xf32>, vector<16x8xf32> -> vector<16x8xf32>
    %36 = vector.extract_strided_slice %18 {offsets = [0, 8], sizes = [16, 8], strides = [1, 1]} : vector<16x128xf32> to vector<16x8xf32>
    %37 = vector.extract_strided_slice %18 {offsets = [0, 40], sizes = [16, 8], strides = [1, 1]} : vector<16x128xf32> to vector<16x8xf32>
    %38 = vector.extract_strided_slice %18 {offsets = [0, 72], sizes = [16, 8], strides = [1, 1]} : vector<16x128xf32> to vector<16x8xf32>
    %cst_14 = arith.constant dense<0.000000e+00> : vector<16x16xf32>
    %39 = tpu.matmul %36, %37, %cst_14 {dimension_numbers = #tpu.dot_dimension_numbers<[1], [1], [0], [0], [0, 0, 1, 0], [], []>} : vector<16x8xf32>, vector<16x8xf32>, vector<16x16xf32> -> vector<16x16xf32>
    %cst_15 = arith.constant 0.353553385 : f32
    %40 = vector.broadcast %cst_15 : f32 to vector<16x16xf32>
    %41 = arith.mulf %39, %40 : vector<16x16xf32>
    %42 = arith.addf %41, %13 : vector<16x16xf32>
    %cst_16 = arith.constant dense<0xFF800000> : vector<16xf32>
    %43 = vector.multi_reduction <maximumf>, %42, %cst_16 [1] : vector<16x16xf32> to vector<16xf32>
    %44 = vector.shape_cast %43 : vector<16xf32> to vector<16x1xf32>
    %45 = vector.broadcast %44 : vector<16x1xf32> to vector<16x16xf32>
    %46 = arith.subf %42, %45 : vector<16x16xf32>
    %47 = math.exp %46 : vector<16x16xf32>
    %cst_17 = arith.constant dense<0.000000e+00> : vector<16xf32>
    %48 = vector.multi_reduction <add>, %47, %cst_17 [1] : vector<16x16xf32> to vector<16xf32>
    %49 = vector.shape_cast %48 : vector<16xf32> to vector<16x1xf32>
    %50 = vector.broadcast %49 : vector<16x1xf32> to vector<16x16xf32>
    %51 = arith.divf %47, %50 : vector<16x16xf32>
    %cst_18 = arith.constant dense<0.000000e+00> : vector<16x8xf32>
    %52 = tpu.matmul %51, %38, %cst_18 {dimension_numbers = #tpu.dot_dimension_numbers<[1], [0], [0], [1], [0, 0, 1, 1], [], []>} : vector<16x16xf32>, vector<16x8xf32>, vector<16x8xf32> -> vector<16x8xf32>
    %53 = vector.extract_strided_slice %18 {offsets = [0, 16], sizes = [16, 8], strides = [1, 1]} : vector<16x128xf32> to vector<16x8xf32>
    %54 = vector.extract_strided_slice %18 {offsets = [0, 48], sizes = [16, 8], strides = [1, 1]} : vector<16x128xf32> to vector<16x8xf32>
    %55 = vector.extract_strided_slice %18 {offsets = [0, 80], sizes = [16, 8], strides = [1, 1]} : vector<16x128xf32> to vector<16x8xf32>
    %cst_19 = arith.constant dense<0.000000e+00> : vector<16x16xf32>
    %56 = tpu.matmul %53, %54, %cst_19 {dimension_numbers = #tpu.dot_dimension_numbers<[1], [1], [0], [0], [0, 0, 1, 0], [], []>} : vector<16x8xf32>, vector<16x8xf32>, vector<16x16xf32> -> vector<16x16xf32>
    %cst_20 = arith.constant 0.353553385 : f32
    %57 = vector.broadcast %cst_20 : f32 to vector<16x16xf32>
    %58 = arith.mulf %56, %57 : vector<16x16xf32>
    %59 = arith.addf %58, %13 : vector<16x16xf32>
    %cst_21 = arith.constant dense<0xFF800000> : vector<16xf32>
    %60 = vector.multi_reduction <maximumf>, %59, %cst_21 [1] : vector<16x16xf32> to vector<16xf32>
    %61 = vector.shape_cast %60 : vector<16xf32> to vector<16x1xf32>
    %62 = vector.broadcast %61 : vector<16x1xf32> to vector<16x16xf32>
    %63 = arith.subf %59, %62 : vector<16x16xf32>
    %64 = math.exp %63 : vector<16x16xf32>
    %cst_22 = arith.constant dense<0.000000e+00> : vector<16xf32>
    %65 = vector.multi_reduction <add>, %64, %cst_22 [1] : vector<16x16xf32> to vector<16xf32>
    %66 = vector.shape_cast %65 : vector<16xf32> to vector<16x1xf32>
    %67 = vector.broadcast %66 : vector<16x1xf32> to vector<16x16xf32>
    %68 = arith.divf %64, %67 : vector<16x16xf32>
    %cst_23 = arith.constant dense<0.000000e+00> : vector<16x8xf32>
    %69 = tpu.matmul %68, %55, %cst_23 {dimension_numbers = #tpu.dot_dimension_numbers<[1], [0], [0], [1], [0, 0, 1, 1], [], []>} : vector<16x16xf32>, vector<16x8xf32>, vector<16x8xf32> -> vector<16x8xf32>
    %70 = vector.extract_strided_slice %18 {offsets = [0, 24], sizes = [16, 8], strides = [1, 1]} : vector<16x128xf32> to vector<16x8xf32>
    %71 = vector.extract_strided_slice %18 {offsets = [0, 56], sizes = [16, 8], strides = [1, 1]} : vector<16x128xf32> to vector<16x8xf32>
    %72 = vector.extract_strided_slice %18 {offsets = [0, 88], sizes = [16, 8], strides = [1, 1]} : vector<16x128xf32> to vector<16x8xf32>
    %cst_24 = arith.constant dense<0.000000e+00> : vector<16x16xf32>
    %73 = tpu.matmul %70, %71, %cst_24 {dimension_numbers = #tpu.dot_dimension_numbers<[1], [1], [0], [0], [0, 0, 1, 0], [], []>} : vector<16x8xf32>, vector<16x8xf32>, vector<16x16xf32> -> vector<16x16xf32>
    %cst_25 = arith.constant 0.353553385 : f32
    %74 = vector.broadcast %cst_25 : f32 to vector<16x16xf32>
    %75 = arith.mulf %73, %74 : vector<16x16xf32>
    %76 = arith.addf %75, %13 : vector<16x16xf32>
    %cst_26 = arith.constant dense<0xFF800000> : vector<16xf32>
    %77 = vector.multi_reduction <maximumf>, %76, %cst_26 [1] : vector<16x16xf32> to vector<16xf32>
    %78 = vector.shape_cast %77 : vector<16xf32> to vector<16x1xf32>
    %79 = vector.broadcast %78 : vector<16x1xf32> to vector<16x16xf32>
    %80 = arith.subf %76, %79 : vector<16x16xf32>
    %81 = math.exp %80 : vector<16x16xf32>
    %cst_27 = arith.constant dense<0.000000e+00> : vector<16xf32>
    %82 = vector.multi_reduction <add>, %81, %cst_27 [1] : vector<16x16xf32> to vector<16xf32>
    %83 = vector.shape_cast %82 : vector<16xf32> to vector<16x1xf32>
    %84 = vector.broadcast %83 : vector<16x1xf32> to vector<16x16xf32>
    %85 = arith.divf %81, %84 : vector<16x16xf32>
    %cst_28 = arith.constant dense<0.000000e+00> : vector<16x8xf32>
    %86 = tpu.matmul %85, %72, %cst_28 {dimension_numbers = #tpu.dot_dimension_numbers<[1], [0], [0], [1], [0, 0, 1, 1], [], []>} : vector<16x16xf32>, vector<16x8xf32>, vector<16x8xf32> -> vector<16x8xf32>
    %87 = tpu.concatenate %35, %52, %69, %86 in 1 : vector<16x8xf32>, vector<16x8xf32>, vector<16x8xf32>, vector<16x8xf32> -> vector<16x32xf32>
    %c0_29 = arith.constant 0 : index
    %c0_30 = arith.constant 0 : index
    %88 = vector.load %arg3[%c0_29, %c0_30] : memref<32x32xf32, #tpu.memory_space<vmem>>, vector<32x32xf32>
    %cst_31 = arith.constant dense<0.000000e+00> : vector<16x32xf32>
    %89 = tpu.matmul %87, %88, %cst_31 {dimension_numbers = #tpu.dot_dimension_numbers<[1], [0], [0], [1], [0, 0, 1, 1], [], []>} : vector<16x32xf32>, vector<32x32xf32>, vector<16x32xf32> -> vector<16x32xf32>
    %90 = vector.extract_strided_slice %1 {offsets = [1, 0], sizes = [1, 32], strides = [1, 1]} : vector<8x128xf32> to vector<1x32xf32>
    %91 = vector.broadcast %90 : vector<1x32xf32> to vector<16x32xf32>
    %92 = arith.addf %89, %91 : vector<16x32xf32>
    %93 = arith.addf %0, %92 : vector<16x32xf32>
    %94 = vector.extract_strided_slice %1 {offsets = [4, 0], sizes = [1, 32], strides = [1, 1]} : vector<8x128xf32> to vector<1x32xf32>
    %95 = vector.extract_strided_slice %1 {offsets = [5, 0], sizes = [1, 32], strides = [1, 1]} : vector<8x128xf32> to vector<1x32xf32>
    %cst_32 = arith.constant dense<0.000000e+00> : vector<16xf32>
    %96 = vector.multi_reduction <add>, %93, %cst_32 [1] : vector<16x32xf32> to vector<16xf32>
    %97 = vector.shape_cast %96 : vector<16xf32> to vector<16x1xf32>
    %cst_33 = arith.constant 3.200000e+01 : f32
    %98 = vector.broadcast %cst_33 : f32 to vector<16x1xf32>
    %99 = arith.divf %97, %98 : vector<16x1xf32>
    %100 = vector.broadcast %99 : vector<16x1xf32> to vector<16x32xf32>
    %101 = arith.subf %93, %100 : vector<16x32xf32>
    %102 = arith.mulf %101, %101 : vector<16x32xf32>
    %cst_34 = arith.constant dense<0.000000e+00> : vector<16xf32>
    %103 = vector.multi_reduction <add>, %102, %cst_34 [1] : vector<16x32xf32> to vector<16xf32>
    %104 = vector.shape_cast %103 : vector<16xf32> to vector<16x1xf32>
    %cst_35 = arith.constant 3.200000e+01 : f32
    %105 = vector.broadcast %cst_35 : f32 to vector<16x1xf32>
    %106 = arith.divf %104, %105 : vector<16x1xf32>
    %107 = vector.broadcast %99 : vector<16x1xf32> to vector<16x32xf32>
    %108 = arith.subf %93, %107 : vector<16x32xf32>
    %cst_36 = arith.constant 9.99999996E-13 : f32
    %109 = vector.broadcast %cst_36 : f32 to vector<16x1xf32>
    %110 = arith.addf %106, %109 : vector<16x1xf32>
    %111 = math.rsqrt %110 : vector<16x1xf32>
    %112 = vector.broadcast %111 : vector<16x1xf32> to vector<16x32xf32>
    %113 = arith.mulf %108, %112 : vector<16x32xf32>
    %114 = vector.broadcast %94 : vector<1x32xf32> to vector<16x32xf32>
    %115 = arith.mulf %113, %114 : vector<16x32xf32>
    %116 = vector.broadcast %95 : vector<1x32xf32> to vector<16x32xf32>
    %117 = arith.addf %115, %116 : vector<16x32xf32>
    %c0_37 = arith.constant 0 : index
    %c0_38 = arith.constant 0 : index
    %118 = vector.load %arg4[%c0_37, %c0_38] : memref<32x128xf32, #tpu.memory_space<vmem>>, vector<32x128xf32>
    %cst_39 = arith.constant dense<0.000000e+00> : vector<16x128xf32>
    %119 = tpu.matmul %117, %118, %cst_39 {dimension_numbers = #tpu.dot_dimension_numbers<[1], [0], [0], [1], [0, 0, 1, 1], [], []>} : vector<16x32xf32>, vector<32x128xf32>, vector<16x128xf32> -> vector<16x128xf32>
    %120 = vector.extract_strided_slice %1 {offsets = [2, 0], sizes = [1, 128], strides = [1, 1]} : vector<8x128xf32> to vector<1x128xf32>
    %121 = vector.broadcast %120 : vector<1x128xf32> to vector<16x128xf32>
    %122 = arith.addf %119, %121 : vector<16x128xf32>
    %cst_40 = arith.constant 5.000000e-01 : f32
    %123 = vector.broadcast %cst_40 : f32 to vector<16x128xf32>
    %124 = arith.mulf %123, %122 : vector<16x128xf32>
    %cst_41 = arith.constant 0.707106769 : f32
    %125 = vector.broadcast %cst_41 : f32 to vector<16x128xf32>
    %126 = arith.mulf %122, %125 : vector<16x128xf32>
    %127 = math.erf %126 : vector<16x128xf32>
    %cst_42 = arith.constant 1.000000e+00 : f32
    %128 = vector.broadcast %cst_42 : f32 to vector<16x128xf32>
    %129 = arith.addf %128, %127 : vector<16x128xf32>
    %130 = arith.mulf %124, %129 : vector<16x128xf32>
    %c0_43 = arith.constant 0 : index
    %c0_44 = arith.constant 0 : index
    %131 = vector.load %arg5[%c0_43, %c0_44] : memref<128x32xf32, #tpu.memory_space<vmem>>, vector<128x32xf32>
    %cst_45 = arith.constant dense<0.000000e+00> : vector<16x32xf32>
    %132 = tpu.matmul %130, %131, %cst_45 {dimension_numbers = #tpu.dot_dimension_numbers<[1], [0], [0], [1], [0, 0, 1, 1], [], []>} : vector<16x128xf32>, vector<128x32xf32>, vector<16x32xf32> -> vector<16x32xf32>
    %133 = vector.extract_strided_slice %1 {offsets = [3, 0], sizes = [1, 32], strides = [1, 1]} : vector<8x128xf32> to vector<1x32xf32>
    %134 = vector.broadcast %133 : vector<1x32xf32> to vector<16x32xf32>
    %135 = arith.addf %132, %134 : vector<16x32xf32>
    %136 = arith.addf %117, %135 : vector<16x32xf32>
    %137 = vector.extract_strided_slice %1 {offsets = [6, 0], sizes = [1, 32], strides = [1, 1]} : vector<8x128xf32> to vector<1x32xf32>
    %138 = vector.extract_strided_slice %1 {offsets = [7, 0], sizes = [1, 32], strides = [1, 1]} : vector<8x128xf32> to vector<1x32xf32>
    %cst_46 = arith.constant dense<0.000000e+00> : vector<16xf32>
    %139 = vector.multi_reduction <add>, %136, %cst_46 [1] : vector<16x32xf32> to vector<16xf32>
    %140 = vector.shape_cast %139 : vector<16xf32> to vector<16x1xf32>
    %cst_47 = arith.constant 3.200000e+01 : f32
    %141 = vector.broadcast %cst_47 : f32 to vector<16x1xf32>
    %142 = arith.divf %140, %141 : vector<16x1xf32>
    %143 = vector.broadcast %142 : vector<16x1xf32> to vector<16x32xf32>
    %144 = arith.subf %136, %143 : vector<16x32xf32>
    %145 = arith.mulf %144, %144 : vector<16x32xf32>
    %cst_48 = arith.constant dense<0.000000e+00> : vector<16xf32>
    %146 = vector.multi_reduction <add>, %145, %cst_48 [1] : vector<16x32xf32> to vector<16xf32>
    %147 = vector.shape_cast %146 : vector<16xf32> to vector<16x1xf32>
    %cst_49 = arith.constant 3.200000e+01 : f32
    %148 = vector.broadcast %cst_49 : f32 to vector<16x1xf32>
    %149 = arith.divf %147, %148 : vector<16x1xf32>
    %150 = vector.broadcast %142 : vector<16x1xf32> to vector<16x32xf32>
    %151 = arith.subf %136, %150 : vector<16x32xf32>
    %cst_50 = arith.constant 9.99999996E-13 : f32
    %152 = vector.broadcast %cst_50 : f32 to vector<16x1xf32>
    %153 = arith.addf %149, %152 : vector<16x1xf32>
    %154 = math.rsqrt %153 : vector<16x1xf32>
    %155 = vector.broadcast %154 : vector<16x1xf32> to vector<16x32xf32>
    %156 = arith.mulf %151, %155 : vector<16x32xf32>
    %157 = vector.broadcast %137 : vector<1x32xf32> to vector<16x32xf32>
    %158 = arith.mulf %156, %157 : vector<16x32xf32>
    %159 = vector.broadcast %138 : vector<1x32xf32> to vector<16x32xf32>
    %160 = arith.addf %158, %159 : vector<16x32xf32>
    %cst_51 = arith.constant 0.000000e+00 : f32
    %161 = vector.broadcast %cst_51 : f32 to vector<16x96xf32>
    %162 = tpu.concatenate %160, %161 in 1 : vector<16x32xf32>, vector<16x96xf32> -> vector<16x128xf32>
    %c0_52 = arith.constant 0 : index
    %c0_53 = arith.constant 0 : index
    %163 = vector.load %arg7[%c0_52, %c0_53] : memref<16x128xf32, #tpu.memory_space<vmem>>, vector<16x128xf32>
    tpu.vector_store %arg7[%c0_52, %c0_53], %162 {strides = array<i32>} : memref<16x128xf32, #tpu.memory_space<vmem>>, vector<16x128xf32>,
    return
  }
}

</mosaic_0001>

<llo_original>
// kernel: bert_block.1
$region0: #{bert_block.1}
  #allocation0 [shape = 'u32[]', space=smem, size = 0x4, offset = 0x4, fixed_abs, tag = 'smem constant byte address 0x4 - core index']
  #allocation1 [shape = 'u32[144,128]{1,0:T(1,128)}', space=vmem, size = 0x12000, scoped, tag = 'internal scratch']
  %s0 = inlined_call_operand.vmem [shape: f32[16,32], index: 0, kind: input, shape index: {}]
  %s1 = inlined_call_operand.vmem [shape: f32[1,16], index: 1, kind: input, shape index: {}]
  %s2 = inlined_call_operand.vmem [shape: f32[32,128], index: 2, kind: input, shape index: {}]
  %s3 = inlined_call_operand.vmem [shape: f32[32,32], index: 3, kind: input, shape index: {}]
  %s4 = inlined_call_operand.vmem [shape: f32[32,128], index: 4, kind: input, shape index: {}]
  %s5 = inlined_call_operand.vmem [shape: f32[128,32], index: 5, kind: input, shape index: {}]
  %s6 = inlined_call_operand.vmem [shape: f32[8,128], index: 6, kind: input, shape index: {}]
  %s7 = inlined_call_operand.vmem [shape: f32[16,128], index: 7, kind: output, shape index: {}]
  %s8 = sld [smem:[#allocation0]]
  $region38: #{bert_block.1} parent=0
    _
  %s10 = ssub.s32 1, %s8
  %s11 = scalar_select 0, %s10, %s8
  // Predicated region
  $region2: #{bert_block.1} parent=0 // pred_check
    _
  $region3: #{bert_block.1} parent=0 // pred_check_branch
    %13 = sbr.rel (0) target = $region5
  $region4: #{bert_block.1} parent=0 // pred_region
    _
  $region5: #{bert_block.1} parent=0 // pred_fallthru
    _
  // Predicated region
  $region6: #{bert_block.1} parent=0 // pred_check
    _
  $region7: #{bert_block.1} parent=0 // pred_check_branch
    %15 = sbr.rel (0) target = $region9
  $region8: #{bert_block.1} parent=0 // pred_region
    _
  $region9: #{bert_block.1} parent=0 // pred_fallthru
    _
  // Predicated region
  $region10: #{bert_block.1} parent=0 // pred_check
    _
  $region11: #{bert_block.1} parent=0 // pred_check_branch
    %17 = sbr.rel (0) target = $region13
  $region12: #{bert_block.1} parent=0 // pred_region
    _
  $region13: #{bert_block.1} parent=0 // pred_fallthru
    _
  // Predicated region
  $region14: #{bert_block.1} parent=0 // pred_check
    _
  $region15: #{bert_block.1} parent=0 // pred_check_branch
    %19 = sbr.rel (0) target = $region17
  $region16: #{bert_block.1} parent=0 // pred_region
    _
  $region17: #{bert_block.1} parent=0 // pred_fallthru
    _
  // Predicated region
  $region18: #{bert_block.1} parent=0 // pred_check
    _
  $region19: #{bert_block.1} parent=0 // pred_check_branch
    %21 = sbr.rel (0) target = $region21
  $region20: #{bert_block.1} parent=0 // pred_region
    _
  $region21: #{bert_block.1} parent=0 // pred_fallthru
    _
  // Predicated region
  $region22: #{bert_block.1} parent=0 // pred_check
    _
  $region23: #{bert_block.1} parent=0 // pred_check_branch
    %23 = sbr.rel (0) target = $region25
  $region24: #{bert_block.1} parent=0 // pred_region
    _
  $region25: #{bert_block.1} parent=0 // pred_fallthru
    _
  // Predicated region
  $region26: #{bert_block.1} parent=0 // pred_check
    _
  $region27: #{bert_block.1} parent=0 // pred_check_branch
    %25 = sbr.rel (0) target = $region29
  $region28: #{bert_block.1} parent=0 // pred_region
    _
  $region29: #{bert_block.1} parent=0 // pred_fallthru
    _
  %v26 = vld [vmem:[%s0] sm:$0xff]
  %v27 = vld [vmem:[%s0 + $0x8] sm:$0xff]
  %v28 = vld [vmem:[%s6] sm:$0xff]
  %v29 = vlaneseq
  %v30 = vshrl.u32 %v29, 7
  %v31 = vadd.s32 %v30, 8
  %v32 = vlaneseq
  %v33 = vand.u32 %v32, 127
  %v34 = vshra.s32 %v30, 3
  %v35 = vshra.s32 %v31, 3
  %v36 = vshra.s32 %v33, 3
  %v37 = vld [vmem:[%s1] sm:$0x1]
  %v39 = vlaneseq
  %v40 = vshrl.u32 %v39, 7
  %v41 = vsub.s32 0, %v40
  %v42 = vrot.slane %v37, %v41
  %vm44 = vcmp.eq.s32.totalorder %v34, %v36
  %vm45 = vcmp.eq.s32.totalorder %v35, %v36
  %v46 = vsel %vm44, %v42, -1e+09
  %v47 = vsel %vm45, %v42, -1e+09
  %v48 = vld [vmem:[%s2] sm:$0xff]
  %v49 = vld [vmem:[%s2 + $0x8] sm:$0xff]
  %v50 = vld [vmem:[%s2 + $0x10] sm:$0xff]
  %v51 = vld [vmem:[%s2 + $0x18] sm:$0xff]
  %v52 = vlaneseq
  %v53 = vshrl.u32 %v52, 7
  %v54 = vsub.s32 0, %v53
  %v55 = vrot.slane %v28, %v54
  %vm56 = vcmask 261120
  %v58 = vsel %vm56, %v26, 0
  %v61 = vsel %vm56, %v27, 0
  %63 = vmatprep.subr.mxu0 0.0
  %64 = vmatpush1.msra.mxu0 %v48
  %65 = vmatprep.subr.mxu0 0.0
  %66 = vmatpush1.msra.mxu0 %v49
  %67 = vmatprep.subr.mxu0 0.0
  %68 = vmatpush1.msra.mxu0 %v50
  %69 = vmatprep.subr.mxu0 0.0
  %70 = vmatpush1.msra.mxu0 %v51
  %71 = vmatprep.subr.mxu0 0.0
  %72 = vmatpush1.msra.mxu0 0.0
  %73 = vmatprep.subr.mxu0 0.0
  %74 = vmatpush1.msra.mxu0 0.0
  %75 = vmatprep.subr.mxu0 0.0
  %76 = vmatpush1.msra.mxu0 0.0
  %77 = vmatprep.subr.mxu0 0.0
  %78 = vmatpush1.msra.mxu0 0.0
  %79 = vmatprep.subr.mxu0 0.0
  %80 = vmatpush1.msra.mxu0 0.0
  %81 = vmatprep.subr.mxu0 0.0
  %82 = vmatpush1.msra.mxu0 0.0
  %83 = vmatprep.subr.mxu0 0.0
  %84 = vmatpush1.msra.mxu0 0.0
  %85 = vmatprep.subr.mxu0 0.0
  %86 = vmatpush1.msra.mxu0 0.0
  %87 = vmatprep.subr.mxu0 0.0
  %88 = vmatpush1.msra.mxu0 0.0
  %89 = vmatprep.subr.mxu0 0.0
  %90 = vmatpush1.msra.mxu0 0.0
  %91 = vmatprep.subr.mxu0 0.0
  %92 = vmatpush1.msra.mxu0 0.0
  %93 = vmatprep.subr.mxu0 0.0
  %94 = vmatpush1.msra.mxu0 0.0
  %95 = vmatprep.subr.mxu0 0.0
  %96 = vmatpush1.msra.mxu0 0.0
  %97 = vmatprep.subr.mxu0 0.0
  %98 = vmatpush1.msra.mxu0 0.0
  %99 = vmatprep.subr.mxu0 0.0
  %100 = vmatpush1.msra.mxu0 0.0
  %101 = vmatprep.subr.mxu0 0.0
  %102 = vmatpush1.msra.mxu0 0.0
  %103 = vmatprep.subr.mxu0 0.0
  %104 = vmatpush1.msra.mxu0 0.0
  %105 = vmatprep.subr.mxu0 0.0
  %106 = vmatpush1.msra.mxu0 0.0
  %107 = vmatprep.subr.mxu0 0.0
  %108 = vmatpush1.msra.mxu0 0.0
  %109 = vmatprep.subr.mxu0 0.0
  %110 = vmatpush1.msra.mxu0 0.0
  %111 = vmatprep.subr.mxu0 0.0
  %112 = vmatpush1.msra.mxu0 0.0
  %113 = vmatprep.subr.mxu0 0.0
  %114 = vmatpush1.msra.mxu0 0.0
  %115 = vmatprep.subr.mxu0 0.0
  %116 = vmatpush1.msra.mxu0 0.0
  %117 = vmatprep.subr.mxu0 0.0
  %118 = vmatpush1.msra.mxu0 0.0
  %119 = vmatprep.subr.mxu0 0.0
  %120 = vmatpush1.msra.mxu0 0.0
  %121 = vmatprep.subr.mxu0 0.0
  %122 = vmatpush1.msra.mxu0 0.0
  %123 = vmatprep.subr.mxu0 0.0
  %124 = vmatpush1.msra.mxu0 0.0
  %125 = vmatprep.subr.mxu0 0.0
  %126 = vmatpush1.msra.mxu0 0.0
  %127 = vmatprep.mubr.f32.mxu0 0.0
  %128 = vmatmul.mubr.f32.gmra.mrb[0].mxu0 %v58
  %v129 = vpop.f32.mrb[0].mxu0
  %v130 = vadd.f32 %v55, %v129
  %v131 = vpop.f32.mrb[0].mxu0
  %132 = vmatprep.mubr.f32.mxu0 0.0
  %133 = vmatmul.mubr.f32.gmra.mrb[0].mxu0 %v61
  %v134 = vpop.f32.mrb[0].mxu0
  %v135 = vadd.f32 %v55, %v134
  %v136 = vpop.f32.mrb[0].mxu0
  %137 = vdwg.mxu0
  %140 = vrot.lane.b32.xlu0 %v130, 96
  %v141 = vpop.permute.xlu0 %140
  %142 = vrot.lane.b32.xlu0 %v135, 96
  %v143 = vpop.permute.xlu0 %142
  %vm144 = vcmask 64512
  %v145 = vsel %vm144, %v130, 0
  %v147 = vsel %vm144, %v135, 0
  %v149 = vsel %vm144, %v141, 0
  %v151 = vsel %vm144, %v143, 0
  %153 = vmatprep.subr.mxu0 0.0
  %154 = vmatpush1.xpose.msra.mxu0 %v149
  %155 = vmatprep.subr.mxu0 0.0
  %156 = vmatpush1.xpose.msra.mxu0 %v151
  %157 = vmatprep.subr.mxu0 0.0
  %158 = vmatpush1.xpose.msra.mxu0 0.0
  %159 = vmatprep.subr.mxu0 0.0
  %160 = vmatpush1.xpose.msra.mxu0 0.0
  %161 = vmatprep.subr.mxu0 0.0
  %162 = vmatpush1.xpose.msra.mxu0 0.0
  %163 = vmatprep.subr.mxu0 0.0
  %164 = vmatpush1.xpose.msra.mxu0 0.0
  %165 = vmatprep.subr.mxu0 0.0
  %166 = vmatpush1.xpose.msra.mxu0 0.0
  %167 = vmatprep.subr.mxu0 0.0
  %168 = vmatpush1.xpose.msra.mxu0 0.0
  %169 = vmatprep.subr.mxu0 0.0
  %170 = vmatpush1.xpose.msra.mxu0 0.0
  %171 = vmatprep.subr.mxu0 0.0
  %172 = vmatpush1.xpose.msra.mxu0 0.0
  %173 = vmatprep.subr.mxu0 0.0
  %174 = vmatpush1.xpose.msra.mxu0 0.0
  %175 = vmatprep.subr.mxu0 0.0
  %176 = vmatpush1.xpose.msra.mxu0 0.0
  %177 = vmatprep.subr.mxu0 0.0
  %178 = vmatpush1.xpose.msra.mxu0 0.0
  %179 = vmatprep.subr.mxu0 0.0
  %180 = vmatpush1.xpose.msra.mxu0 0.0
  %181 = vmatprep.subr.mxu0 0.0
  %182 = vmatpush1.xpose.msra.mxu0 0.0
  %183 = vmatprep.subr.mxu0 0.0
  %184 = vmatpush1.xpose.msra.mxu0 0.0
  %185 = vmatprep.subr.mxu0 0.0
  %186 = vmatpush1.xpose.msra.mxu0 0.0
  %187 = vmatprep.subr.mxu0 0.0
  %188 = vmatpush1.xpose.msra.mxu0 0.0
  %189 = vmatprep.subr.mxu0 0.0
  %190 = vmatpush1.xpose.msra.mxu0 0.0
  %191 = vmatprep.subr.mxu0 0.0
  %192 = vmatpush1.xpose.msra.mxu0 0.0
  %193 = vmatprep.subr.mxu0 0.0
  %194 = vmatpush1.xpose.msra.mxu0 0.0
  %195 = vmatprep.subr.mxu0 0.0
  %196 = vmatpush1.xpose.msra.mxu0 0.0
  %197 = vmatprep.subr.mxu0 0.0
  %198 = vmatpush1.xpose.msra.mxu0 0.0
  %199 = vmatprep.subr.mxu0 0.0
  %200 = vmatpush1.xpose.msra.mxu0 0.0
  %201 = vmatprep.subr.mxu0 0.0
  %202 = vmatpush1.xpose.msra.mxu0 0.0
  %203 = vmatprep.subr.mxu0 0.0
  %204 = vmatpush1.xpose.msra.mxu0 0.0
  %205 = vmatprep.subr.mxu0 0.0
  %206 = vmatpush1.xpose.msra.mxu0 0.0
  %207 = vmatprep.subr.mxu0 0.0
  %208 = vmatpush1.xpose.msra.mxu0 0.0
  %209 = vmatprep.subr.mxu0 0.0
  %210 = vmatpush1.xpose.msra.mxu0 0.0
  %211 = vmatprep.subr.mxu0 0.0
  %212 = vmatpush1.xpose.msra.mxu0 0.0
  %213 = vmatprep.subr.mxu0 0.0
  %214 = vmatpush1.xpose.msra.mxu0 0.0
  %215 = vmatprep.subr.mxu0 0.0
  %216 = vmatpush1.xpose.msra.mxu0 0.0
  %217 = vmatprep.mubr.f32.mxu0 0.0
  %218 = vmatmul.mubr.f32.gmra.mrb[0].mxu0 %v145
  %v219 = vpop.f32.mrb[0].mxu0
  %v220 = vadd.f32 0.0, %v219
  %v221 = vpop.f32.mrb[0].mxu0
  %222 = vmatprep.mubr.f32.mxu0 0.0
  %223 = vmatmul.mubr.f32.gmra.mrb[0].mxu0 %v147
  %v224 = vpop.f32.mrb[0].mxu0
  %v225 = vadd.f32 0.0, %v224
  %v226 = vpop.f32.mrb[0].mxu0
  %227 = vdwg.mxu0
  %v228 = vmul.f32 %v220, 0.35355338
  %v229 = vmul.f32 %v225, 0.35355338
  %v230 = vadd.f32 %v228, %v46
  %v231 = vadd.f32 %v229, %v47
  %vm232 = vcmask 130048
  %v233 = vsel %vm232, %v230, -inf
  %234 = vmax.xlane.f32.xlu0 %v233
  %v235 = vpop.xlane.xlu0 %234
  %v236 = vsel %vm232, %v231, -inf
  %237 = vmax.xlane.f32.xlu0 %v236
  %v238 = vpop.xlane.xlu0 %237
  %v239 = vsub.f32 %v230, %v235
  %v240 = vsub.f32 %v231, %v238
  %v241 = vmul.f32 %v239, 1.442695
  %v242 = vpow.pop %v241
  %v243 = vmul.f32 %v240, 1.442695
  %v244 = vpow.pop %v243
  %v245 = vsel %vm232, %v242, 0.0
  %246 = vadd.xlane.f32.xlu0 %v245
  %v247 = vpop.xlane.xlu0 %246
  %v248 = vsel %vm232, %v244, 0.0
  %249 = vadd.xlane.f32.xlu0 %v248
  %v250 = vpop.xlane.xlu0 %249
  %v251 = vrcp.pop %v247
  %v252 = vmul.f32 %v242, %v251
  %v253 = vrcp.pop %v250
  %v254 = vmul.f32 %v244, %v253
  %255 = vrot.lane.b32.xlu0 %v130, 64
  %v256 = vpop.permute.xlu0 %255
  %257 = vrot.lane.b32.xlu0 %v135, 64
  %v258 = vpop.permute.xlu0 %257
  %v262 = vsel %vm232, %v252, 0
  %v265 = vsel %vm232, %v254, 0
  %267 = vmatprep.subr.mxu0 0.0
  %268 = vmatpush1.msra.mxu0 %v256
  %269 = vmatprep.subr.mxu0 0.0
  %270 = vmatpush1.msra.mxu0 %v258
  %271 = vmatprep.subr.mxu0 0.0
  %272 = vmatpush1.msra.mxu0 0.0
  %273 = vmatprep.subr.mxu0 0.0
  %274 = vmatpush1.msra.mxu0 0.0
  %275 = vmatprep.subr.mxu0 0.0
  %276 = vmatpush1.msra.mxu0 0.0
  %277 = vmatprep.subr.mxu0 0.0
  %278 = vmatpush1.msra.mxu0 0.0
  %279 = vmatprep.subr.mxu0 0.0
  %280 = vmatpush1.msra.mxu0 0.0
  %281 = vmatprep.subr.mxu0 0.0
  %282 = vmatpush1.msra.mxu0 0.0
  %283 = vmatprep.subr.mxu0 0.0
  %284 = vmatpush1.msra.mxu0 0.0
  %285 = vmatprep.subr.mxu0 0.0
  %286 = vmatpush1.msra.mxu0 0.0
  %287 = vmatprep.subr.mxu0 0.0
  %288 = vmatpush1.msra.mxu0 0.0
  %289 = vmatprep.subr.mxu0 0.0
  %290 = vmatpush1.msra.mxu0 0.0
  %291 = vmatprep.subr.mxu0 0.0
  %292 = vmatpush1.msra.mxu0 0.0
  %293 = vmatprep.subr.mxu0 0.0
  %294 = vmatpush1.msra.mxu0 0.0
  %295 = vmatprep.subr.mxu0 0.0
  %296 = vmatpush1.msra.mxu0 0.0
  %297 = vmatprep.subr.mxu0 0.0
  %298 = vmatpush1.msra.mxu0 0.0
  %299 = vmatprep.subr.mxu0 0.0
  %300 = vmatpush1.msra.mxu0 0.0
  %301 = vmatprep.subr.mxu0 0.0
  %302 = vmatpush1.msra.mxu0 0.0
  %303 = vmatprep.subr.mxu0 0.0
  %304 = vmatpush1.msra.mxu0 0.0
  %305 = vmatprep.subr.mxu0 0.0
  %306 = vmatpush1.msra.mxu0 0.0
  %307 = vmatprep.subr.mxu0 0.0
  %308 = vmatpush1.msra.mxu0 0.0
  %309 = vmatprep.subr.mxu0 0.0
  %310 = vmatpush1.msra.mxu0 0.0
  %311 = vmatprep.subr.mxu0 0.0
  %312 = vmatpush1.msra.mxu0 0.0
  %313 = vmatprep.subr.mxu0 0.0
  %314 = vmatpush1.msra.mxu0 0.0
  %315 = vmatprep.subr.mxu0 0.0
  %316 = vmatpush1.msra.mxu0 0.0
  %317 = vmatprep.subr.mxu0 0.0
  %318 = vmatpush1.msra.mxu0 0.0
  %319 = vmatprep.subr.mxu0 0.0
  %320 = vmatpush1.msra.mxu0 0.0
  %321 = vmatprep.subr.mxu0 0.0
  %322 = vmatpush1.msra.mxu0 0.0
  %323 = vmatprep.subr.mxu0 0.0
  %324 = vmatpush1.msra.mxu0 0.0
  %325 = vmatprep.subr.mxu0 0.0
  %326 = vmatpush1.msra.mxu0 0.0
  %327 = vmatprep.subr.mxu0 0.0
  %328 = vmatpush1.msra.mxu0 0.0
  %329 = vmatprep.subr.mxu0 0.0
  %330 = vmatpush1.msra.mxu0 0.0
  %331 = vmatprep.mubr.f32.mxu0 0.0
  %332 = vmatmul.mubr.f32.gmra.mrb[0].mxu0 %v262
  %v333 = vpop.f32.mrb[0].mxu0
  %v334 = vadd.f32 0.0, %v333
  %v335 = vpop.f32.mrb[0].mxu0
  %336 = vmatprep.mubr.f32.mxu0 0.0
  %337 = vmatmul.mubr.f32.gmra.mrb[0].mxu0 %v265
  %v338 = vpop.f32.mrb[0].mxu0
  %v339 = vadd.f32 0.0, %v338
  %v340 = vpop.f32.mrb[0].mxu0
  %341 = vdwg.mxu0
  %342 = vrot.lane.b32.xlu0 %v130, 120
  %v343 = vpop.permute.xlu0 %342
  %344 = vrot.lane.b32.xlu0 %v135, 120
  %v345 = vpop.permute.xlu0 %344
  %346 = vrot.lane.b32.xlu0 %v130, 88
  %v347 = vpop.permute.xlu0 %346
  %348 = vrot.lane.b32.xlu0 %v135, 88
  %v349 = vpop.permute.xlu0 %348
  %v350 = vsel %vm144, %v343, 0
  %v352 = vsel %vm144, %v345, 0
  %v354 = vsel %vm144, %v347, 0
  %v356 = vsel %vm144, %v349, 0
  %358 = vmatprep.subr.mxu0 0.0
  %359 = vmatpush1.xpose.msra.mxu0 %v354
  %360 = vmatprep.subr.mxu0 0.0
  %361 = vmatpush1.xpose.msra.mxu0 %v356
  %362 = vmatprep.subr.mxu0 0.0
  %363 = vmatpush1.xpose.msra.mxu0 0.0
  %364 = vmatprep.subr.mxu0 0.0
  %365 = vmatpush1.xpose.msra.mxu0 0.0
  %366 = vmatprep.subr.mxu0 0.0
  %367 = vmatpush1.xpose.msra.mxu0 0.0
  %368 = vmatprep.subr.mxu0 0.0
  %369 = vmatpush1.xpose.msra.mxu0 0.0
  %370 = vmatprep.subr.mxu0 0.0
  %371 = vmatpush1.xpose.msra.mxu0 0.0
  %372 = vmatprep.subr.mxu0 0.0
  %373 = vmatpush1.xpose.msra.mxu0 0.0
  %374 = vmatprep.subr.mxu0 0.0
  %375 = vmatpush1.xpose.msra.mxu0 0.0
  %376 = vmatprep.subr.mxu0 0.0
  %377 = vmatpush1.xpose.msra.mxu0 0.0
  %378 = vmatprep.subr.mxu0 0.0
  %379 = vmatpush1.xpose.msra.mxu0 0.0
  %380 = vmatprep.subr.mxu0 0.0
  %381 = vmatpush1.xpose.msra.mxu0 0.0
  %382 = vmatprep.subr.mxu0 0.0
  %383 = vmatpush1.xpose.msra.mxu0 0.0
  %384 = vmatprep.subr.mxu0 0.0
  %385 = vmatpush1.xpose.msra.mxu0 0.0
  %386 = vmatprep.subr.mxu0 0.0
  %387 = vmatpush1.xpose.msra.mxu0 0.0
  %388 = vmatprep.subr.mxu0 0.0
  %389 = vmatpush1.xpose.msra.mxu0 0.0
  %390 = vmatprep.subr.mxu0 0.0
  %391 = vmatpush1.xpose.msra.mxu0 0.0
  %392 = vmatprep.subr.mxu0 0.0
  %393 = vmatpush1.xpose.msra.mxu0 0.0
  %394 = vmatprep.subr.mxu0 0.0
  %395 = vmatpush1.xpose.msra.mxu0 0.0
  %396 = vmatprep.subr.mxu0 0.0
  %397 = vmatpush1.xpose.msra.mxu0 0.0
  %398 = vmatprep.subr.mxu0 0.0
  %399 = vmatpush1.xpose.msra.mxu0 0.0
  %400 = vmatprep.subr.mxu0 0.0
  %401 = vmatpush1.xpose.msra.mxu0 0.0
  %402 = vmatprep.subr.mxu0 0.0
  %403 = vmatpush1.xpose.msra.mxu0 0.0
  %404 = vmatprep.subr.mxu0 0.0
  %405 = vmatpush1.xpose.msra.mxu0 0.0
  %406 = vmatprep.subr.mxu0 0.0
  %407 = vmatpush1.xpose.msra.mxu0 0.0
  %408 = vmatprep.subr.mxu0 0.0
  %409 = vmatpush1.xpose.msra.mxu0 0.0
  %410 = vmatprep.subr.mxu0 0.0
  %411 = vmatpush1.xpose.msra.mxu0 0.0
  %412 = vmatprep.subr.mxu0 0.0
  %413 = vmatpush1.xpose.msra.mxu0 0.0
  %414 = vmatprep.subr.mxu0 0.0
  %415 = vmatpush1.xpose.msra.mxu0 0.0
  %416 = vmatprep.subr.mxu0 0.0
  %417 = vmatpush1.xpose.msra.mxu0 0.0
  %418 = vmatprep.subr.mxu0 0.0
  %419 = vmatpush1.xpose.msra.mxu0 0.0
  %420 = vmatprep.subr.mxu0 0.0
  %421 = vmatpush1.xpose.msra.mxu0 0.0
  %422 = vmatprep.mubr.f32.mxu0 0.0
  %423 = vmatmul.mubr.f32.gmra.mrb[0].mxu0 %v350
  %v424 = vpop.f32.mrb[0].mxu0
  %v425 = vadd.f32 0.0, %v424
  %v426 = vpop.f32.mrb[0].mxu0
  %427 = vmatprep.mubr.f32.mxu0 0.0
  %428 = vmatmul.mubr.f32.gmra.mrb[0].mxu0 %v352
  %v429 = vpop.f32.mrb[0].mxu0
  %v430 = vadd.f32 0.0, %v429
  %v431 = vpop.f32.mrb[0].mxu0
  %432 = vdwg.mxu0
  %v433 = vmul.f32 %v425, 0.35355338
  %v434 = vmul.f32 %v430, 0.35355338
  %v435 = vadd.f32 %v433, %v46
  %v436 = vadd.f32 %v434, %v47
  %v437 = vsel %vm232, %v435, -inf
  %438 = vmax.xlane.f32.xlu0 %v437
  %v439 = vpop.xlane.xlu0 %438
  %v440 = vsel %vm232, %v436, -inf
  %441 = vmax.xlane.f32.xlu0 %v440
  %v442 = vpop.xlane.xlu0 %441
  %v443 = vsub.f32 %v435, %v439
  %v444 = vsub.f32 %v436, %v442
  %v445 = vmul.f32 %v443, 1.442695
  %v446 = vpow.pop %v445
  %v447 = vmul.f32 %v444, 1.442695
  %v448 = vpow.pop %v447
  %v449 = vsel %vm232, %v446, 0.0
  %450 = vadd.xlane.f32.xlu0 %v449
  %v451 = vpop.xlane.xlu0 %450
  %v452 = vsel %vm232, %v448, 0.0
  %453 = vadd.xlane.f32.xlu0 %v452
  %v454 = vpop.xlane.xlu0 %453
  %v455 = vrcp.pop %v451
  %v456 = vmul.f32 %v446, %v455
  %v457 = vrcp.pop %v454
  %v458 = vmul.f32 %v448, %v457
  %459 = vrot.lane.b32.xlu0 %v130, 56
  %v460 = vpop.permute.xlu0 %459
  %461 = vrot.lane.b32.xlu0 %v135, 56
  %v462 = vpop.permute.xlu0 %461
  %v466 = vsel %vm232, %v456, 0
  %v469 = vsel %vm232, %v458, 0
  %471 = vmatprep.subr.mxu0 0.0
  %472 = vmatpush1.msra.mxu0 %v460
  %473 = vmatprep.subr.mxu0 0.0
  %474 = vmatpush1.msra.mxu0 %v462
  %475 = vmatprep.subr.mxu0 0.0
  %476 = vmatpush1.msra.mxu0 0.0
  %477 = vmatprep.subr.mxu0 0.0
  %478 = vmatpush1.msra.mxu0 0.0
  %479 = vmatprep.subr.mxu0 0.0
  %480 = vmatpush1.msra.mxu0 0.0
  %481 = vmatprep.subr.mxu0 0.0
  %482 = vmatpush1.msra.mxu0 0.0
  %483 = vmatprep.subr.mxu0 0.0
  %484 = vmatpush1.msra.mxu0 0.0
  %485 = vmatprep.subr.mxu0 0.0
  %486 = vmatpush1.msra.mxu0 0.0
  %487 = vmatprep.subr.mxu0 0.0
  %488 = vmatpush1.msra.mxu0 0.0
  %489 = vmatprep.subr.mxu0 0.0
  %490 = vmatpush1.msra.mxu0 0.0
  %491 = vmatprep.subr.mxu0 0.0
  %492 = vmatpush1.msra.mxu0 0.0
  %493 = vmatprep.subr.mxu0 0.0
  %494 = vmatpush1.msra.mxu0 0.0
  %495 = vmatprep.subr.mxu0 0.0
  %496 = vmatpush1.msra.mxu0 0.0
  %497 = vmatprep.subr.mxu0 0.0
  %498 = vmatpush1.msra.mxu0 0.0
  %499 = vmatprep.subr.mxu0 0.0
  %500 = vmatpush1.msra.mxu0 0.0
  %501 = vmatprep.subr.mxu0 0.0
  %502 = vmatpush1.msra.mxu0 0.0
  %503 = vmatprep.subr.mxu0 0.0
  %504 = vmatpush1.msra.mxu0 0.0
  %505 = vmatprep.subr.mxu0 0.0
  %506 = vmatpush1.msra.mxu0 0.0
  %507 = vmatprep.subr.mxu0 0.0
  %508 = vmatpush1.msra.mxu0 0.0
  %509 = vmatprep.subr.mxu0 0.0
  %510 = vmatpush1.msra.mxu0 0.0
  %511 = vmatprep.subr.mxu0 0.0
  %512 = vmatpush1.msra.mxu0 0.0
  %513 = vmatprep.subr.mxu0 0.0
  %514 = vmatpush1.msra.mxu0 0.0
  %515 = vmatprep.subr.mxu0 0.0
  %516 = vmatpush1.msra.mxu0 0.0
  %517 = vmatprep.subr.mxu0 0.0
  %518 = vmatpush1.msra.mxu0 0.0
  %519 = vmatprep.subr.mxu0 0.0
  %520 = vmatpush1.msra.mxu0 0.0
  %521 = vmatprep.subr.mxu0 0.0
  %522 = vmatpush1.msra.mxu0 0.0
  %523 = vmatprep.subr.mxu0 0.0
  %524 = vmatpush1.msra.mxu0 0.0
  %525 = vmatprep.subr.mxu0 0.0
  %526 = vmatpush1.msra.mxu0 0.0
  %527 = vmatprep.subr.mxu0 0.0
  %528 = vmatpush1.msra.mxu0 0.0
  %529 = vmatprep.subr.mxu0 0.0
  %530 = vmatpush1.msra.mxu0 0.0
  %531 = vmatprep.subr.mxu0 0.0
  %532 = vmatpush1.msra.mxu0 0.0
  %533 = vmatprep.subr.mxu0 0.0
  %534 = vmatpush1.msra.mxu0 0.0
  %535 = vmatprep.mubr.f32.mxu0 0.0
  %536 = vmatmul.mubr.f32.gmra.mrb[0].mxu0 %v466
  %v537 = vpop.f32.mrb[0].mxu0
  %v538 = vadd.f32 0.0, %v537
  %v539 = vpop.f32.mrb[0].mxu0
  %540 = vmatprep.mubr.f32.mxu0 0.0
  %541 = vmatmul.mubr.f32.gmra.mrb[0].mxu0 %v469
  %v542 = vpop.f32.mrb[0].mxu0
  %v543 = vadd.f32 0.0, %v542
  %v544 = vpop.f32.mrb[0].mxu0
  %545 = vdwg.mxu0
  %546 = vrot.lane.b32.xlu0 %v130, 112
  %v547 = vpop.permute.xlu0 %546
  %548 = vrot.lane.b32.xlu0 %v135, 112
  %v549 = vpop.permute.xlu0 %548
  %550 = vrot.lane.b32.xlu0 %v130, 80
  %v551 = vpop.permute.xlu0 %550
  %552 = vrot.lane.b32.xlu0 %v135, 80
  %v553 = vpop.permute.xlu0 %552
  %v554 = vsel %vm144, %v547, 0
  %v556 = vsel %vm144, %v549, 0
  %v558 = vsel %vm144, %v551, 0
  %v560 = vsel %vm144, %v553, 0
  %562 = vmatprep.subr.mxu0 0.0
  %563 = vmatpush1.xpose.msra.mxu0 %v558
  %564 = vmatprep.subr.mxu0 0.0
  %565 = vmatpush1.xpose.msra.mxu0 %v560
  %566 = vmatprep.subr.mxu0 0.0
  %567 = vmatpush1.xpose.msra.mxu0 0.0
  %568 = vmatprep.subr.mxu0 0.0
  %569 = vmatpush1.xpose.msra.mxu0 0.0
  %570 = vmatprep.subr.mxu0 0.0
  %571 = vmatpush1.xpose.msra.mxu0 0.0
  %572 = vmatprep.subr.mxu0 0.0
  %573 = vmatpush1.xpose.msra.mxu0 0.0
  %574 = vmatprep.subr.mxu0 0.0
  %575 = vmatpush1.xpose.msra.mxu0 0.0
  %576 = vmatprep.subr.mxu0 0.0
  %577 = vmatpush1.xpose.msra.mxu0 0.0
  %578 = vmatprep.subr.mxu0 0.0
  %579 = vmatpush1.xpose.msra.mxu0 0.0
  %580 = vmatprep.subr.mxu0 0.0
  %581 = vmatpush1.xpose.msra.mxu0 0.0
  %582 = vmatprep.subr.mxu0 0.0
  %583 = vmatpush1.xpose.msra.mxu0 0.0
  %584 = vmatprep.subr.mxu0 0.0
  %585 = vmatpush1.xpose.msra.mxu0 0.0
  %586 = vmatprep.subr.mxu0 0.0
  %587 = vmatpush1.xpose.msra.mxu0 0.0
  %588 = vmatprep.subr.mxu0 0.0
  %589 = vmatpush1.xpose.msra.mxu0 0.0
  %590 = vmatprep.subr.mxu0 0.0
  %591 = vmatpush1.xpose.msra.mxu0 0.0
  %592 = vmatprep.subr.mxu0 0.0
  %593 = vmatpush1.xpose.msra.mxu0 0.0
  %594 = vmatprep.subr.mxu0 0.0
  %595 = vmatpush1.xpose.msra.mxu0 0.0
  %596 = vmatprep.subr.mxu0 0.0
  %597 = vmatpush1.xpose.msra.mxu0 0.0
  %598 = vmatprep.subr.mxu0 0.0
  %599 = vmatpush1.xpose.msra.mxu0 0.0
  %600 = vmatprep.subr.mxu0 0.0
  %601 = vmatpush1.xpose.msra.mxu0 0.0
  %602 = vmatprep.subr.mxu0 0.0
  %603 = vmatpush1.xpose.msra.mxu0 0.0
  %604 = vmatprep.subr.mxu0 0.0
  %605 = vmatpush1.xpose.msra.mxu0 0.0
  %606 = vmatprep.subr.mxu0 0.0
  %607 = vmatpush1.xpose.msra.mxu0 0.0
  %608 = vmatprep.subr.mxu0 0.0
  %609 = vmatpush1.xpose.msra.mxu0 0.0
  %610 = vmatprep.subr.mxu0 0.0
  %611 = vmatpush1.xpose.msra.mxu0 0.0
  %612 = vmatprep.subr.mxu0 0.0
  %613 = vmatpush1.xpose.msra.mxu0 0.0
  %614 = vmatprep.subr.mxu0 0.0
  %615 = vmatpush1.xpose.msra.mxu0 0.0
  %616 = vmatprep.subr.mxu0 0.0
  %617 = vmatpush1.xpose.msra.mxu0 0.0
  %618 = vmatprep.subr.mxu0 0.0
  %619 = vmatpush1.xpose.msra.mxu0 0.0
  %620 = vmatprep.subr.mxu0 0.0
  %621 = vmatpush1.xpose.msra.mxu0 0.0
  %622 = vmatprep.subr.mxu0 0.0
  %623 = vmatpush1.xpose.msra.mxu0 0.0
  %624 = vmatprep.subr.mxu0 0.0
  %625 = vmatpush1.xpose.msra.mxu0 0.0
  %626 = vmatprep.mubr.f32.mxu0 0.0
  %627 = vmatmul.mubr.f32.gmra.mrb[0].mxu0 %v554
  %v628 = vpop.f32.mrb[0].mxu0
  %v629 = vadd.f32 0.0, %v628
  %v630 = vpop.f32.mrb[0].mxu0
  %631 = vmatprep.mubr.f32.mxu0 0.0
  %632 = vmatmul.mubr.f32.gmra.mrb[0].mxu0 %v556
  %v633 = vpop.f32.mrb[0].mxu0
  %v634 = vadd.f32 0.0, %v633
  %v635 = vpop.f32.mrb[0].mxu0
  %636 = vdwg.mxu0
  %v637 = vmul.f32 %v629, 0.35355338
  %v638 = vmul.f32 %v634, 0.35355338
  %v639 = vadd.f32 %v637, %v46
  %v640 = vadd.f32 %v638, %v47
  %v641 = vsel %vm232, %v639, -inf
  %642 = vmax.xlane.f32.xlu0 %v641
  %v643 = vpop.xlane.xlu0 %642
  %v644 = vsel %vm232, %v640, -inf
  %645 = vmax.xlane.f32.xlu0 %v644
  %v646 = vpop.xlane.xlu0 %645
  %v647 = vsub.f32 %v639, %v643
  %v648 = vsub.f32 %v640, %v646
  %v649 = vmul.f32 %v647, 1.442695
  %v650 = vpow.pop %v649
  %v651 = vmul.f32 %v648, 1.442695
  %v652 = vpow.pop %v651
  %v653 = vsel %vm232, %v650, 0.0
  %654 = vadd.xlane.f32.xlu0 %v653
  %v655 = vpop.xlane.xlu0 %654
  %v656 = vsel %vm232, %v652, 0.0
  %657 = vadd.xlane.f32.xlu0 %v656
  %v658 = vpop.xlane.xlu0 %657
  %v659 = vrcp.pop %v655
  %v660 = vmul.f32 %v650, %v659
  %v661 = vrcp.pop %v658
  %v662 = vmul.f32 %v652, %v661
  %663 = vrot.lane.b32.xlu0 %v130, 48
  %v664 = vpop.permute.xlu0 %663
  %665 = vrot.lane.b32.xlu0 %v135, 48
  %v666 = vpop.permute.xlu0 %665
  %v670 = vsel %vm232, %v660, 0
  %v673 = vsel %vm232, %v662, 0
  %675 = vmatprep.subr.mxu0 0.0
  %676 = vmatpush1.msra.mxu0 %v664
  %677 = vmatprep.subr.mxu0 0.0
  %678 = vmatpush1.msra.mxu0 %v666
  %679 = vmatprep.subr.mxu0 0.0
  %680 = vmatpush1.msra.mxu0 0.0
  %681 = vmatprep.subr.mxu0 0.0
  %682 = vmatpush1.msra.mxu0 0.0
  %683 = vmatprep.subr.mxu0 0.0
  %684 = vmatpush1.msra.mxu0 0.0
  %685 = vmatprep.subr.mxu0 0.0
  %686 = vmatpush1.msra.mxu0 0.0
  %687 = vmatprep.subr.mxu0 0.0
  %688 = vmatpush1.msra.mxu0 0.0
  %689 = vmatprep.subr.mxu0 0.0
  %690 = vmatpush1.msra.mxu0 0.0
  %691 = vmatprep.subr.mxu0 0.0
  %692 = vmatpush1.msra.mxu0 0.0
  %693 = vmatprep.subr.mxu0 0.0
  %694 = vmatpush1.msra.mxu0 0.0
  %695 = vmatprep.subr.mxu0 0.0
  %696 = vmatpush1.msra.mxu0 0.0
  %697 = vmatprep.subr.mxu0 0.0
  %698 = vmatpush1.msra.mxu0 0.0
  %699 = vmatprep.subr.mxu0 0.0
  %700 = vmatpush1.msra.mxu0 0.0
  %701 = vmatprep.subr.mxu0 0.0
  %702 = vmatpush1.msra.mxu0 0.0
  %703 = vmatprep.subr.mxu0 0.0
  %704 = vmatpush1.msra.mxu0 0.0
  %705 = vmatprep.subr.mxu0 0.0
  %706 = vmatpush1.msra.mxu0 0.0
  %707 = vmatprep.subr.mxu0 0.0
  %708 = vmatpush1.msra.mxu0 0.0
  %709 = vmatprep.subr.mxu0 0.0
  %710 = vmatpush1.msra.mxu0 0.0
  %711 = vmatprep.subr.mxu0 0.0
  %712 = vmatpush1.msra.mxu0 0.0
  %713 = vmatprep.subr.mxu0 0.0
  %714 = vmatpush1.msra.mxu0 0.0
  %715 = vmatprep.subr.mxu0 0.0
  %716 = vmatpush1.msra.mxu0 0.0
  %717 = vmatprep.subr.mxu0 0.0
  %718 = vmatpush1.msra.mxu0 0.0
  %719 = vmatprep.subr.mxu0 0.0
  %720 = vmatpush1.msra.mxu0 0.0
  %721 = vmatprep.subr.mxu0 0.0
  %722 = vmatpush1.msra.mxu0 0.0
  %723 = vmatprep.subr.mxu0 0.0
  %724 = vmatpush1.msra.mxu0 0.0
  %725 = vmatprep.subr.mxu0 0.0
  %726 = vmatpush1.msra.mxu0 0.0
  %727 = vmatprep.subr.mxu0 0.0
  %728 = vmatpush1.msra.mxu0 0.0
  %729 = vmatprep.subr.mxu0 0.0
  %730 = vmatpush1.msra.mxu0 0.0
  %731 = vmatprep.subr.mxu0 0.0
  %732 = vmatpush1.msra.mxu0 0.0
  %733 = vmatprep.subr.mxu0 0.0
  %734 = vmatpush1.msra.mxu0 0.0
  %735 = vmatprep.subr.mxu0 0.0
  %736 = vmatpush1.msra.mxu0 0.0
  %737 = vmatprep.subr.mxu0 0.0
  %738 = vmatpush1.msra.mxu0 0.0
  %739 = vmatprep.mubr.f32.mxu0 0.0
  %740 = vmatmul.mubr.f32.gmra.mrb[0].mxu0 %v670
  %v741 = vpop.f32.mrb[0].mxu0
  %v742 = vadd.f32 0.0, %v741
  %v743 = vpop.f32.mrb[0].mxu0
  %744 = vmatprep.mubr.f32.mxu0 0.0
  %745 = vmatmul.mubr.f32.gmra.mrb[0].mxu0 %v673
  %v746 = vpop.f32.mrb[0].mxu0
  %v747 = vadd.f32 0.0, %v746
  %v748 = vpop.f32.mrb[0].mxu0
  %749 = vdwg.mxu0
  %750 = vrot.lane.b32.xlu0 %v130, 104
  %v751 = vpop.permute.xlu0 %750
  %752 = vrot.lane.b32.xlu0 %v135, 104
  %v753 = vpop.permute.xlu0 %752
  %754 = vrot.lane.b32.xlu0 %v130, 72
  %v755 = vpop.permute.xlu0 %754
  %756 = vrot.lane.b32.xlu0 %v135, 72
  %v757 = vpop.permute.xlu0 %756
  %v758 = vsel %vm144, %v751, 0
  %v760 = vsel %vm144, %v753, 0
  %v762 = vsel %vm144, %v755, 0
  %v764 = vsel %vm144, %v757, 0
  %766 = vmatprep.subr.mxu0 0.0
  %767 = vmatpush1.xpose.msra.mxu0 %v762
  %768 = vmatprep.subr.mxu0 0.0
  %769 = vmatpush1.xpose.msra.mxu0 %v764
  %770 = vmatprep.subr.mxu0 0.0
  %771 = vmatpush1.xpose.msra.mxu0 0.0
  %772 = vmatprep.subr.mxu0 0.0
  %773 = vmatpush1.xpose.msra.mxu0 0.0
  %774 = vmatprep.subr.mxu0 0.0
  %775 = vmatpush1.xpose.msra.mxu0 0.0
  %776 = vmatprep.subr.mxu0 0.0
  %777 = vmatpush1.xpose.msra.mxu0 0.0
  %778 = vmatprep.subr.mxu0 0.0
  %779 = vmatpush1.xpose.msra.mxu0 0.0
  %780 = vmatprep.subr.mxu0 0.0
  %781 = vmatpush1.xpose.msra.mxu0 0.0
  %782 = vmatprep.subr.mxu0 0.0
  %783 = vmatpush1.xpose.msra.mxu0 0.0
  %784 = vmatprep.subr.mxu0 0.0
  %785 = vmatpush1.xpose.msra.mxu0 0.0
  %786 = vmatprep.subr.mxu0 0.0
  %787 = vmatpush1.xpose.msra.mxu0 0.0
  %788 = vmatprep.subr.mxu0 0.0
  %789 = vmatpush1.xpose.msra.mxu0 0.0
  %790 = vmatprep.subr.mxu0 0.0
  %791 = vmatpush1.xpose.msra.mxu0 0.0
  %792 = vmatprep.subr.mxu0 0.0
  %793 = vmatpush1.xpose.msra.mxu0 0.0
  %794 = vmatprep.subr.mxu0 0.0
  %795 = vmatpush1.xpose.msra.mxu0 0.0
  %796 = vmatprep.subr.mxu0 0.0
  %797 = vmatpush1.xpose.msra.mxu0 0.0
  %798 = vmatprep.subr.mxu0 0.0
  %799 = vmatpush1.xpose.msra.mxu0 0.0
  %800 = vmatprep.subr.mxu0 0.0
  %801 = vmatpush1.xpose.msra.mxu0 0.0
  %802 = vmatprep.subr.mxu0 0.0
  %803 = vmatpush1.xpose.msra.mxu0 0.0
  %804 = vmatprep.subr.mxu0 0.0
  %805 = vmatpush1.xpose.msra.mxu0 0.0
  %806 = vmatprep.subr.mxu0 0.0
  %807 = vmatpush1.xpose.msra.mxu0 0.0
  %808 = vmatprep.subr.mxu0 0.0
  %809 = vmatpush1.xpose.msra.mxu0 0.0
  %810 = vmatprep.subr.mxu0 0.0
  %811 = vmatpush1.xpose.msra.mxu0 0.0
  %812 = vmatprep.subr.mxu0 0.0
  %813 = vmatpush1.xpose.msra.mxu0 0.0
  %814 = vmatprep.subr.mxu0 0.0
  %815 = vmatpush1.xpose.msra.mxu0 0.0
  %816 = vmatprep.subr.mxu0 0.0
  %817 = vmatpush1.xpose.msra.mxu0 0.0
  %818 = vmatprep.subr.mxu0 0.0
  %819 = vmatpush1.xpose.msra.mxu0 0.0
  %820 = vmatprep.subr.mxu0 0.0
  %821 = vmatpush1.xpose.msra.mxu0 0.0
  %822 = vmatprep.subr.mxu0 0.0
  %823 = vmatpush1.xpose.msra.mxu0 0.0
  %824 = vmatprep.subr.mxu0 0.0
  %825 = vmatpush1.xpose.msra.mxu0 0.0
  %826 = vmatprep.subr.mxu0 0.0
  %827 = vmatpush1.xpose.msra.mxu0 0.0
  %828 = vmatprep.subr.mxu0 0.0
  %829 = vmatpush1.xpose.msra.mxu0 0.0
  %830 = vmatprep.mubr.f32.mxu0 0.0
  %831 = vmatmul.mubr.f32.gmra.mrb[0].mxu0 %v758
  %v832 = vpop.f32.mrb[0].mxu0
  %v833 = vadd.f32 0.0, %v832
  %v834 = vpop.f32.mrb[0].mxu0
  %835 = vmatprep.mubr.f32.mxu0 0.0
  %836 = vmatmul.mubr.f32.gmra.mrb[0].mxu0 %v760
  %v837 = vpop.f32.mrb[0].mxu0
  %v838 = vadd.f32 0.0, %v837
  %v839 = vpop.f32.mrb[0].mxu0
  %840 = vdwg.mxu0
  %v841 = vmul.f32 %v833, 0.35355338
  %v842 = vmul.f32 %v838, 0.35355338
  %v843 = vadd.f32 %v841, %v46
  %v844 = vadd.f32 %v842, %v47
  %v845 = vsel %vm232, %v843, -inf
  %846 = vmax.xlane.f32.xlu0 %v845
  %v847 = vpop.xlane.xlu0 %846
  %v848 = vsel %vm232, %v844, -inf
  %849 = vmax.xlane.f32.xlu0 %v848
  %v850 = vpop.xlane.xlu0 %849
  %v851 = vsub.f32 %v843, %v847
  %v852 = vsub.f32 %v844, %v850
  %v853 = vmul.f32 %v851, 1.442695
  %v854 = vpow.pop %v853
  %v855 = vmul.f32 %v852, 1.442695
  %v856 = vpow.pop %v855
  %v857 = vsel %vm232, %v854, 0.0
  %858 = vadd.xlane.f32.xlu0 %v857
  %v859 = vpop.xlane.xlu0 %858
  %v860 = vsel %vm232, %v856, 0.0
  %861 = vadd.xlane.f32.xlu0 %v860
  %v862 = vpop.xlane.xlu0 %861
  %v863 = vrcp.pop %v859
  %v864 = vmul.f32 %v854, %v863
  %v865 = vrcp.pop %v862
  %v866 = vmul.f32 %v856, %v865
  %867 = vrot.lane.b32.xlu0 %v130, 40
  %v868 = vpop.permute.xlu0 %867
  %869 = vrot.lane.b32.xlu0 %v135, 40
  %v870 = vpop.permute.xlu0 %869
  %v874 = vsel %vm232, %v864, 0
  %v877 = vsel %vm232, %v866, 0
  %879 = vmatprep.subr.mxu0 0.0
  %880 = vmatpush1.msra.mxu0 %v868
  %881 = vmatprep.subr.mxu0 0.0
  %882 = vmatpush1.msra.mxu0 %v870
  %883 = vmatprep.subr.mxu0 0.0
  %884 = vmatpush1.msra.mxu0 0.0
  %885 = vmatprep.subr.mxu0 0.0
  %886 = vmatpush1.msra.mxu0 0.0
  %887 = vmatprep.subr.mxu0 0.0
  %888 = vmatpush1.msra.mxu0 0.0
  %889 = vmatprep.subr.mxu0 0.0
  %890 = vmatpush1.msra.mxu0 0.0
  %891 = vmatprep.subr.mxu0 0.0
  %892 = vmatpush1.msra.mxu0 0.0
  %893 = vmatprep.subr.mxu0 0.0
  %894 = vmatpush1.msra.mxu0 0.0
  %895 = vmatprep.subr.mxu0 0.0
  %896 = vmatpush1.msra.mxu0 0.0
  %897 = vmatprep.subr.mxu0 0.0
  %898 = vmatpush1.msra.mxu0 0.0
  %899 = vmatprep.subr.mxu0 0.0
  %900 = vmatpush1.msra.mxu0 0.0
  %901 = vmatprep.subr.mxu0 0.0
  %902 = vmatpush1.msra.mxu0 0.0
  %903 = vmatprep.subr.mxu0 0.0
  %904 = vmatpush1.msra.mxu0 0.0
  %905 = vmatprep.subr.mxu0 0.0
  %906 = vmatpush1.msra.mxu0 0.0
  %907 = vmatprep.subr.mxu0 0.0
  %908 = vmatpush1.msra.mxu0 0.0
  %909 = vmatprep.subr.mxu0 0.0
  %910 = vmatpush1.msra.mxu0 0.0
  %911 = vmatprep.subr.mxu0 0.0
  %912 = vmatpush1.msra.mxu0 0.0
  %913 = vmatprep.subr.mxu0 0.0
  %914 = vmatpush1.msra.mxu0 0.0
  %915 = vmatprep.subr.mxu0 0.0
  %916 = vmatpush1.msra.mxu0 0.0
  %917 = vmatprep.subr.mxu0 0.0
  %918 = vmatpush1.msra.mxu0 0.0
  %919 = vmatprep.subr.mxu0 0.0
  %920 = vmatpush1.msra.mxu0 0.0
  %921 = vmatprep.subr.mxu0 0.0
  %922 = vmatpush1.msra.mxu0 0.0
  %923 = vmatprep.subr.mxu0 0.0
  %924 = vmatpush1.msra.mxu0 0.0
  %925 = vmatprep.subr.mxu0 0.0
  %926 = vmatpush1.msra.mxu0 0.0
  %927 = vmatprep.subr.mxu0 0.0
  %928 = vmatpush1.msra.mxu0 0.0
  %929 = vmatprep.subr.mxu0 0.0
  %930 = vmatpush1.msra.mxu0 0.0
  %931 = vmatprep.subr.mxu0 0.0
  %932 = vmatpush1.msra.mxu0 0.0
  %933 = vmatprep.subr.mxu0 0.0
  %934 = vmatpush1.msra.mxu0 0.0
  %935 = vmatprep.subr.mxu0 0.0
  %936 = vmatpush1.msra.mxu0 0.0
  %937 = vmatprep.subr.mxu0 0.0
  %938 = vmatpush1.msra.mxu0 0.0
  %939 = vmatprep.subr.mxu0 0.0
  %940 = vmatpush1.msra.mxu0 0.0
  %941 = vmatprep.subr.mxu0 0.0
  %942 = vmatpush1.msra.mxu0 0.0
  %943 = vmatprep.mubr.f32.mxu0 0.0
  %944 = vmatmul.mubr.f32.gmra.mrb[0].mxu0 %v874
  %v945 = vpop.f32.mrb[0].mxu0
  %v946 = vadd.f32 0.0, %v945
  %v947 = vpop.f32.mrb[0].mxu0
  %948 = vmatprep.mubr.f32.mxu0 0.0
  %949 = vmatmul.mubr.f32.gmra.mrb[0].mxu0 %v877
  %v950 = vpop.f32.mrb[0].mxu0
  %v951 = vadd.f32 0.0, %v950
  %v952 = vpop.f32.mrb[0].mxu0
  %953 = vdwg.mxu0
  %956 = vrot.lane.b32.xlu0 %v538, 8
  %v957 = vpop.permute.xlu0 %956
  %958 = vrot.lane.b32.xlu0 %v543, 8
  %v959 = vpop.permute.xlu0 %958
  %964 = vrot.lane.b32.xlu0 %v742, 16
  %v965 = vpop.permute.xlu0 %964
  %966 = vrot.lane.b32.xlu0 %v747, 16
  %v967 = vpop.permute.xlu0 %966
  %972 = vrot.lane.b32.xlu0 %v946, 24
  %v973 = vpop.permute.xlu0 %972
  %974 = vrot.lane.b32.xlu0 %v951, 24
  %v975 = vpop.permute.xlu0 %974
  %v978 = vsel %vm144, %v334, %v957
  %v979 = vsel %vm144, %v339, %v959
  %v980 = vsel %vm232, %v978, %v965
  %v981 = vsel %vm232, %v979, %v967
  %vm982 = vcmask 195584
  %v983 = vsel %vm982, %v980, %v973
  %v984 = vsel %vm982, %v981, %v975
  %v985 = vld [vmem:[%s3] sm:$0xff]
  %v986 = vld [vmem:[%s3 + $0x8] sm:$0xff]
  %v987 = vld [vmem:[%s3 + $0x10] sm:$0xff]
  %v988 = vld [vmem:[%s3 + $0x18] sm:$0xff]
  %v989 = vlaneseq
  %v990 = vshrl.u32 %v989, 7
  %v991 = vsub.s32 1, %v990
  %v992 = vrot.slane %v28, %v991
  %v994 = vsel %vm56, %v983, 0
  %v997 = vsel %vm56, %v984, 0
  %999 = vmatprep.subr.mxu0 0.0
  %1000 = vmatpush1.msra.mxu0 %v985
  %1001 = vmatprep.subr.mxu0 0.0
  %1002 = vmatpush1.msra.mxu0 %v986
  %1003 = vmatprep.subr.mxu0 0.0
  %1004 = vmatpush1.msra.mxu0 %v987
  %1005 = vmatprep.subr.mxu0 0.0
  %1006 = vmatpush1.msra.mxu0 %v988
  %1007 = vmatprep.subr.mxu0 0.0
  %1008 = vmatpush1.msra.mxu0 0.0
  %1009 = vmatprep.subr.mxu0 0.0
  %1010 = vmatpush1.msra.mxu0 0.0
  %1011 = vmatprep.subr.mxu0 0.0
  %1012 = vmatpush1.msra.mxu0 0.0
  %1013 = vmatprep.subr.mxu0 0.0
  %1014 = vmatpush1.msra.mxu0 0.0
  %1015 = vmatprep.subr.mxu0 0.0
  %1016 = vmatpush1.msra.mxu0 0.0
  %1017 = vmatprep.subr.mxu0 0.0
  %1018 = vmatpush1.msra.mxu0 0.0
  %1019 = vmatprep.subr.mxu0 0.0
  %1020 = vmatpush1.msra.mxu0 0.0
  %1021 = vmatprep.subr.mxu0 0.0
  %1022 = vmatpush1.msra.mxu0 0.0
  %1023 = vmatprep.subr.mxu0 0.0
  %1024 = vmatpush1.msra.mxu0 0.0
  %1025 = vmatprep.subr.mxu0 0.0
  %1026 = vmatpush1.msra.mxu0 0.0
  %1027 = vmatprep.subr.mxu0 0.0
  %1028 = vmatpush1.msra.mxu0 0.0
  %1029 = vmatprep.subr.mxu0 0.0
  %1030 = vmatpush1.msra.mxu0 0.0
  %1031 = vmatprep.subr.mxu0 0.0
  %1032 = vmatpush1.msra.mxu0 0.0
  %1033 = vmatprep.subr.mxu0 0.0
  %1034 = vmatpush1.msra.mxu0 0.0
  %1035 = vmatprep.subr.mxu0 0.0
  %1036 = vmatpush1.msra.mxu0 0.0
  %1037 = vmatprep.subr.mxu0 0.0
  %1038 = vmatpush1.msra.mxu0 0.0
  %1039 = vmatprep.subr.mxu0 0.0
  %1040 = vmatpush1.msra.mxu0 0.0
  %1041 = vmatprep.subr.mxu0 0.0
  %1042 = vmatpush1.msra.mxu0 0.0
  %1043 = vmatprep.subr.mxu0 0.0
  %1044 = vmatpush1.msra.mxu0 0.0
  %1045 = vmatprep.subr.mxu0 0.0
  %1046 = vmatpush1.msra.mxu0 0.0
  %1047 = vmatprep.subr.mxu0 0.0
  %1048 = vmatpush1.msra.mxu0 0.0
  %1049 = vmatprep.subr.mxu0 0.0
  %1050 = vmatpush1.msra.mxu0 0.0
  %1051 = vmatprep.subr.mxu0 0.0
  %1052 = vmatpush1.msra.mxu0 0.0
  %1053 = vmatprep.subr.mxu0 0.0
  %1054 = vmatpush1.msra.mxu0 0.0
  %1055 = vmatprep.subr.mxu0 0.0
  %1056 = vmatpush1.msra.mxu0 0.0
  %1057 = vmatprep.subr.mxu0 0.0
  %1058 = vmatpush1.msra.mxu0 0.0
  %1059 = vmatprep.subr.mxu0 0.0
  %1060 = vmatpush1.msra.mxu0 0.0
  %1061 = vmatprep.subr.mxu0 0.0
  %1062 = vmatpush1.msra.mxu0 0.0
  %1063 = vmatprep.mubr.f32.mxu0 0.0
  %1064 = vmatmul.mubr.f32.gmra.mrb[0].mxu0 %v994
  %v1065 = vpop.f32.mrb[0].mxu0
  %v1066 = vadd.f32 %v992, %v1065
  %v1067 = vpop.f32.mrb[0].mxu0
  %1068 = vmatprep.mubr.f32.mxu0 0.0
  %1069 = vmatmul.mubr.f32.gmra.mrb[0].mxu0 %v997
  %v1070 = vpop.f32.mrb[0].mxu0
  %v1071 = vadd.f32 %v992, %v1070
  %v1072 = vpop.f32.mrb[0].mxu0
  %1073 = vdwg.mxu0
  %v1074 = vadd.f32 %v26, %v1066
  %v1075 = vadd.f32 %v27, %v1071
  %v1076 = vsel %vm56, %v1074, 0.0
  %1077 = vadd.xlane.f32.xlu0 %v1076
  %v1078 = vpop.xlane.xlu0 %1077
  %v1079 = vsel %vm56, %v1075, 0.0
  %1080 = vadd.xlane.f32.xlu0 %v1079
  %v1081 = vpop.xlane.xlu0 %1080
  %v1082 = vrcp.pop 32.0
  %v1083 = vmul.f32 %v1078, %v1082
  %v1084 = vmul.f32 %v1081, %v1082
  %v1085 = vsub.f32 %v1074, %v1083
  %v1086 = vsub.f32 %v1075, %v1084
  %v1087 = vmul.f32 %v1085, %v1085
  %v1088 = vmul.f32 %v1086, %v1086
  %v1089 = vsel %vm56, %v1087, 0.0
  %1090 = vadd.xlane.f32.xlu0 %v1089
  %v1091 = vpop.xlane.xlu0 %1090
  %v1092 = vsel %vm56, %v1088, 0.0
  %1093 = vadd.xlane.f32.xlu0 %v1092
  %v1094 = vpop.xlane.xlu0 %1093
  %v1095 = vmul.f32 %v1091, %v1082
  %v1096 = vmul.f32 %v1094, %v1082
  %v1097 = vadd.f32 %v1095, 1e-12
  %v1098 = vadd.f32 %v1096, 1e-12
  %v1099 = vrsqrt.pop %v1097
  %v1100 = vrsqrt.pop %v1098
  %v1101 = vmul.f32 %v1085, %v1099
  %v1102 = vmul.f32 %v1086, %v1100
  %v1103 = vlaneseq
  %v1104 = vshrl.u32 %v1103, 7
  %v1105 = vsub.s32 4, %v1104
  %v1106 = vrot.slane %v28, %v1105
  %v1107 = vmul.f32 %v1101, %v1106
  %v1108 = vmul.f32 %v1102, %v1106
  %v1109 = vlaneseq
  %v1110 = vshrl.u32 %v1109, 7
  %v1111 = vsub.s32 5, %v1110
  %v1112 = vrot.slane %v28, %v1111
  %v1113 = vadd.f32 %v1107, %v1112
  %v1114 = vadd.f32 %v1108, %v1112
  %v1115 = vld [vmem:[%s4] sm:$0xff]
  %v1116 = vld [vmem:[%s4 + $0x8] sm:$0xff]
  %v1117 = vld [vmem:[%s4 + $0x10] sm:$0xff]
  %v1118 = vld [vmem:[%s4 + $0x18] sm:$0xff]
  %v1119 = vlaneseq
  %v1120 = vshrl.u32 %v1119, 7
  %v1121 = vsub.s32 2, %v1120
  %v1122 = vrot.slane %v28, %v1121
  %v1124 = vsel %vm56, %v1113, 0
  %v1127 = vsel %vm56, %v1114, 0
  %1129 = vmatprep.subr.mxu0 0.0
  %1130 = vmatpush1.msra.mxu0 %v1115
  %1131 = vmatprep.subr.mxu0 0.0
  %1132 = vmatpush1.msra.mxu0 %v1116
  %1133 = vmatprep.subr.mxu0 0.0
  %1134 = vmatpush1.msra.mxu0 %v1117
  %1135 = vmatprep.subr.mxu0 0.0
  %1136 = vmatpush1.msra.mxu0 %v1118
  %1137 = vmatprep.subr.mxu0 0.0
  %1138 = vmatpush1.msra.mxu0 0.0
  %1139 = vmatprep.subr.mxu0 0.0
  %1140 = vmatpush1.msra.mxu0 0.0
  %1141 = vmatprep.subr.mxu0 0.0
  %1142 = vmatpush1.msra.mxu0 0.0
  %1143 = vmatprep.subr.mxu0 0.0
  %1144 = vmatpush1.msra.mxu0 0.0
  %1145 = vmatprep.subr.mxu0 0.0
  %1146 = vmatpush1.msra.mxu0 0.0
  %1147 = vmatprep.subr.mxu0 0.0
  %1148 = vmatpush1.msra.mxu0 0.0
  %1149 = vmatprep.subr.mxu0 0.0
  %1150 = vmatpush1.msra.mxu0 0.0
  %1151 = vmatprep.subr.mxu0 0.0
  %1152 = vmatpush1.msra.mxu0 0.0
  %1153 = vmatprep.subr.mxu0 0.0
  %1154 = vmatpush1.msra.mxu0 0.0
  %1155 = vmatprep.subr.mxu0 0.0
  %1156 = vmatpush1.msra.mxu0 0.0
  %1157 = vmatprep.subr.mxu0 0.0
  %1158 = vmatpush1.msra.mxu0 0.0
  %1159 = vmatprep.subr.mxu0 0.0
  %1160 = vmatpush1.msra.mxu0 0.0
  %1161 = vmatprep.subr.mxu0 0.0
  %1162 = vmatpush1.msra.mxu0 0.0
  %1163 = vmatprep.subr.mxu0 0.0
  %1164 = vmatpush1.msra.mxu0 0.0
  %1165 = vmatprep.subr.mxu0 0.0
  %1166 = vmatpush1.msra.mxu0 0.0
  %1167 = vmatprep.subr.mxu0 0.0
  %1168 = vmatpush1.msra.mxu0 0.0
  %1169 = vmatprep.subr.mxu0 0.0
  %1170 = vmatpush1.msra.mxu0 0.0
  %1171 = vmatprep.subr.mxu0 0.0
  %1172 = vmatpush1.msra.mxu0 0.0
  %1173 = vmatprep.subr.mxu0 0.0
  %1174 = vmatpush1.msra.mxu0 0.0
  %1175 = vmatprep.subr.mxu0 0.0
  %1176 = vmatpush1.msra.mxu0 0.0
  %1177 = vmatprep.subr.mxu0 0.0
  %1178 = vmatpush1.msra.mxu0 0.0
  %1179 = vmatprep.subr.mxu0 0.0
  %1180 = vmatpush1.msra.mxu0 0.0
  %1181 = vmatprep.subr.mxu0 0.0
  %1182 = vmatpush1.msra.mxu0 0.0
  %1183 = vmatprep.subr.mxu0 0.0
  %1184 = vmatpush1.msra.mxu0 0.0
  %1185 = vmatprep.subr.mxu0 0.0
  %1186 = vmatpush1.msra.mxu0 0.0
  %1187 = vmatprep.subr.mxu0 0.0
  %1188 = vmatpush1.msra.mxu0 0.0
  %1189 = vmatprep.subr.mxu0 0.0
  %1190 = vmatpush1.msra.mxu0 0.0
  %1191 = vmatprep.subr.mxu0 0.0
  %1192 = vmatpush1.msra.mxu0 0.0
  %1193 = vmatprep.mubr.f32.mxu0 0.0
  %1194 = vmatmul.mubr.f32.gmra.mrb[0].mxu0 %v1124
  %v1195 = vpop.f32.mrb[0].mxu0
  %v1196 = vadd.f32 %v1122, %v1195
  %v1197 = vpop.f32.mrb[0].mxu0
  %1198 = vmatprep.mubr.f32.mxu0 0.0
  %1199 = vmatmul.mubr.f32.gmra.mrb[0].mxu0 %v1127
  %v1200 = vpop.f32.mrb[0].mxu0
  %v1201 = vadd.f32 %v1122, %v1200
  %v1202 = vpop.f32.mrb[0].mxu0
  %1203 = vdwg.mxu0
  %v1204 = vmul.f32 %v1196, 0.5
  %v1205 = vmul.f32 %v1201, 0.5
  %v1206 = vmul.f32 %v1196, 0.70710677
  %v1207 = vmul.f32 %v1201, 0.70710677
  %v1208 = verf.f32.pop %v1206
  %v1209 = verf.f32.pop %v1207
  %v1210 = vadd.f32 %v1208, 1.0
  %v1211 = vadd.f32 %v1209, 1.0
  %v1212 = vmul.f32 %v1204, %v1210
  %v1213 = vmul.f32 %v1205, %v1211
  %v1214 = vld [vmem:[%s5] sm:$0xff]
  %v1215 = vld [vmem:[%s5 + $0x8] sm:$0xff]
  %v1216 = vld [vmem:[%s5 + $0x10] sm:$0xff]
  %v1217 = vld [vmem:[%s5 + $0x18] sm:$0xff]
  %v1218 = vld [vmem:[%s5 + $0x20] sm:$0xff]
  %v1219 = vld [vmem:[%s5 + $0x28] sm:$0xff]
  %v1220 = vld [vmem:[%s5 + $0x30] sm:$0xff]
  %v1221 = vld [vmem:[%s5 + $0x38] sm:$0xff]
  %v1222 = vld [vmem:[%s5 + $0x40] sm:$0xff]
  %v1223 = vld [vmem:[%s5 + $0x48] sm:$0xff]
  %v1224 = vld [vmem:[%s5 + $0x50] sm:$0xff]
  %v1225 = vld [vmem:[%s5 + $0x58] sm:$0xff]
  %v1226 = vld [vmem:[%s5 + $0x60] sm:$0xff]
  %v1227 = vld [vmem:[%s5 + $0x68] sm:$0xff]
  %v1228 = vld [vmem:[%s5 + $0x70] sm:$0xff]
  %v1229 = vld [vmem:[%s5 + $0x78] sm:$0xff]
  %v1230 = vlaneseq
  %v1231 = vshrl.u32 %v1230, 7
  %v1232 = vsub.s32 3, %v1231
  %v1233 = vrot.slane %v28, %v1232
  %1234 = vmatprep.subr.mxu0 0.0
  %1235 = vmatpush1.msra.mxu0 %v1214
  %1236 = vmatprep.subr.mxu0 0.0
  %1237 = vmatpush1.msra.mxu0 %v1215
  %1238 = vmatprep.subr.mxu0 0.0
  %1239 = vmatpush1.msra.mxu0 %v1216
  %1240 = vmatprep.subr.mxu0 0.0
  %1241 = vmatpush1.msra.mxu0 %v1217
  %1242 = vmatprep.subr.mxu0 0.0
  %1243 = vmatpush1.msra.mxu0 %v1218
  %1244 = vmatprep.subr.mxu0 0.0
  %1245 = vmatpush1.msra.mxu0 %v1219
  %1246 = vmatprep.subr.mxu0 0.0
  %1247 = vmatpush1.msra.mxu0 %v1220
  %1248 = vmatprep.subr.mxu0 0.0
  %1249 = vmatpush1.msra.mxu0 %v1221
  %1250 = vmatprep.subr.mxu0 0.0
  %1251 = vmatpush1.msra.mxu0 %v1222
  %1252 = vmatprep.subr.mxu0 0.0
  %1253 = vmatpush1.msra.mxu0 %v1223
  %1254 = vmatprep.subr.mxu0 0.0
  %1255 = vmatpush1.msra.mxu0 %v1224
  %1256 = vmatprep.subr.mxu0 0.0
  %1257 = vmatpush1.msra.mxu0 %v1225
  %1258 = vmatprep.subr.mxu0 0.0
  %1259 = vmatpush1.msra.mxu0 %v1226
  %1260 = vmatprep.subr.mxu0 0.0
  %1261 = vmatpush1.msra.mxu0 %v1227
  %1262 = vmatprep.subr.mxu0 0.0
  %1263 = vmatpush1.msra.mxu0 %v1228
  %1264 = vmatprep.subr.mxu0 0.0
  %1265 = vmatpush1.msra.mxu0 %v1229
  %1266 = vmatprep.subr.mxu0 0.0
  %1267 = vmatpush1.msra.mxu0 0.0
  %1268 = vmatprep.subr.mxu0 0.0
  %1269 = vmatpush1.msra.mxu0 0.0
  %1270 = vmatprep.subr.mxu0 0.0
  %1271 = vmatpush1.msra.mxu0 0.0
  %1272 = vmatprep.subr.mxu0 0.0
  %1273 = vmatpush1.msra.mxu0 0.0
  %1274 = vmatprep.subr.mxu0 0.0
  %1275 = vmatpush1.msra.mxu0 0.0
  %1276 = vmatprep.subr.mxu0 0.0
  %1277 = vmatpush1.msra.mxu0 0.0
  %1278 = vmatprep.subr.mxu0 0.0
  %1279 = vmatpush1.msra.mxu0 0.0
  %1280 = vmatprep.subr.mxu0 0.0
  %1281 = vmatpush1.msra.mxu0 0.0
  %1282 = vmatprep.subr.mxu0 0.0
  %1283 = vmatpush1.msra.mxu0 0.0
  %1284 = vmatprep.subr.mxu0 0.0
  %1285 = vmatpush1.msra.mxu0 0.0
  %1286 = vmatprep.subr.mxu0 0.0
  %1287 = vmatpush1.msra.mxu0 0.0
  %1288 = vmatprep.subr.mxu0 0.0
  %1289 = vmatpush1.msra.mxu0 0.0
  %1290 = vmatprep.subr.mxu0 0.0
  %1291 = vmatpush1.msra.mxu0 0.0
  %1292 = vmatprep.subr.mxu0 0.0
  %1293 = vmatpush1.msra.mxu0 0.0
  %1294 = vmatprep.subr.mxu0 0.0
  %1295 = vmatpush1.msra.mxu0 0.0
  %1296 = vmatprep.subr.mxu0 0.0
  %1297 = vmatpush1.msra.mxu0 0.0
  %1298 = vmatprep.mubr.f32.mxu0 0.0
  %1299 = vmatmul.mubr.f32.gmra.mrb[0].mxu0 %v1212
  %v1300 = vpop.f32.mrb[0].mxu0
  %v1301 = vadd.f32 %v1233, %v1300
  %v1302 = vpop.f32.mrb[0].mxu0
  %1303 = vmatprep.mubr.f32.mxu0 0.0
  %1304 = vmatmul.mubr.f32.gmra.mrb[0].mxu0 %v1213
  %v1305 = vpop.f32.mrb[0].mxu0
  %v1306 = vadd.f32 %v1233, %v1305
  %v1307 = vpop.f32.mrb[0].mxu0
  %1308 = vdwg.mxu0
  %v1309 = vadd.f32 %v1113, %v1301
  %v1310 = vadd.f32 %v1114, %v1306
  %v1311 = vsel %vm56, %v1309, 0.0
  %1312 = vadd.xlane.f32.xlu0 %v1311
  %v1313 = vpop.xlane.xlu0 %1312
  %v1314 = vsel %vm56, %v1310, 0.0
  %1315 = vadd.xlane.f32.xlu0 %v1314
  %v1316 = vpop.xlane.xlu0 %1315
  %v1317 = vmul.f32 %v1313, %v1082
  %v1318 = vmul.f32 %v1316, %v1082
  %v1319 = vsub.f32 %v1309, %v1317
  %v1320 = vsub.f32 %v1310, %v1318
  %v1321 = vmul.f32 %v1319, %v1319
  %v1322 = vmul.f32 %v1320, %v1320
  %v1323 = vsel %vm56, %v1321, 0.0
  %1324 = vadd.xlane.f32.xlu0 %v1323
  %v1325 = vpop.xlane.xlu0 %1324
  %v1326 = vsel %vm56, %v1322, 0.0
  %1327 = vadd.xlane.f32.xlu0 %v1326
  %v1328 = vpop.xlane.xlu0 %1327
  %v1329 = vmul.f32 %v1325, %v1082
  %v1330 = vmul.f32 %v1328, %v1082
  %v1331 = vadd.f32 %v1329, 1e-12
  %v1332 = vadd.f32 %v1330, 1e-12
  %v1333 = vrsqrt.pop %v1331
  %v1334 = vrsqrt.pop %v1332
  %v1335 = vmul.f32 %v1319, %v1333
  %v1336 = vmul.f32 %v1320, %v1334
  %v1337 = vlaneseq
  %v1338 = vshrl.u32 %v1337, 7
  %v1339 = vsub.s32 6, %v1338
  %v1340 = vrot.slane %v28, %v1339
  %v1341 = vmul.f32 %v1335, %v1340
  %v1342 = vmul.f32 %v1336, %v1340
  %v1343 = vlaneseq
  %v1344 = vshrl.u32 %v1343, 7
  %v1345 = vsub.s32 7, %v1344
  %v1346 = vrot.slane %v28, %v1345
  %v1347 = vadd.f32 %v1341, %v1346
  %v1348 = vadd.f32 %v1342, %v1346
  %v1349 = vsel %vm56, %v1347, 0.0
  %v1350 = vsel %vm56, %v1348, 0.0
  %1351 = vst [vmem:[%s7] sm:$0xff] %v1349
  %1352 = vst [vmem:[%s7 + $0x8] sm:$0xff] %v1350
  // Predicated region
  $region30: #{bert_block.1} parent=0 // pred_check
    _
  $region31: #{bert_block.1} parent=0 // pred_check_branch
    %1354 = sbr.rel (0) target = $region33
  $region32: #{bert_block.1} parent=0 // pred_region
    _
  $region33: #{bert_block.1} parent=0 // pred_fallthru
    _
  // Predicated region
  $region34: #{bert_block.1} parent=0 // pred_check
    _
  $region35: #{bert_block.1} parent=0 // pred_check_branch
    %1356 = sbr.rel (0) target = $region37
  $region36: #{bert_block.1} parent=0 // pred_region
    _
  $region37: #{bert_block.1} parent=0 // pred_fallthru
    _

</llo_original>
